<compile_context>
chip_gen: v5e
topology: v5e:2x2
jax: 0.10.0
libtpu: 0.0.40
codegen_flags: <defaults>
</compile_context>

<pallas_src>
import functools

import jax
import jax.numpy as jnp
from jax.experimental import pallas as pl
from jax.experimental.pallas import tpu as pltpu

# ----------------------------- config (small ViT-style attention) -----------------------------
B = 2
SEQ = 16                       # multiple of 8 so in-kernel (B*SEQ, d) <-> (B, SEQ, d) retiles cleanly
HIDDEN = 32
NUM_HEADS = 4
HEAD_DIM = HIDDEN // NUM_HEADS
SCALE = 1.0 / (HEAD_DIM ** 0.5)


# --------------------------------------- Pallas kernel ----------------------------------------
def _attention_kernel(x_ref, wq_ref, bq_ref, wk_ref, bk_ref, wv_ref, bv_ref,
                      wo_ref, bo_ref, o_ref, *, batch, seq, num_heads, head_dim):
    """Fused multi-head self-attention over the full batch.

    x_ref           : (batch*seq, hidden)            tokens (batch folded into M)
    wq/wk/wv_ref    : (num_heads, hidden, head_dim)  head-major projection weights
    bq/bk/bv_ref    : (num_heads, 1, head_dim)
    wo_ref          : (num_heads, head_dim, hidden)
    bo_ref          : (1, hidden)
    o_ref           : (batch*seq, hidden)
    """
    x = x_ref[...]                                    # (B*S, H), stays resident
    scale = jnp.float32(1.0 / (head_dim ** 0.5))

    acc = None
    for h in range(num_heads):                        # static unroll; only major-dim indexing
        q = jnp.dot(x, wq_ref[h], preferred_element_type=jnp.float32) + bq_ref[h]
        k = jnp.dot(x, wk_ref[h], preferred_element_type=jnp.float32) + bk_ref[h]
        v = jnp.dot(x, wv_ref[h], preferred_element_type=jnp.float32) + bv_ref[h]

        q3 = q.reshape(batch, seq, head_dim)
        k3 = k.reshape(batch, seq, head_dim)
        v3 = v.reshape(batch, seq, head_dim)

        # scores: batched over the leading batch dim, contracting head_dim (no k.T materialized)
        s = jnp.einsum("bqd,bkd->bqk", q3, k3,
                       preferred_element_type=jnp.float32) * scale
        s = s - jnp.max(s, axis=-1, keepdims=True)
        p = jnp.exp(s)
        p = p * pl.reciprocal(jnp.sum(p, axis=-1, keepdims=True), approx=True)

        ctx = jnp.einsum("bqk,bkd->bqd", p, v3,
                         preferred_element_type=jnp.float32)        # (B, S, head_dim)

        contrib = jnp.dot(ctx.reshape(batch * seq, head_dim), wo_ref[h],
                          preferred_element_type=jnp.float32)        # (B*S, H)
        acc = contrib if acc is None else acc + contrib

    o_ref[...] = acc + bo_ref[...]


# ------------------------------------------ wrapper -------------------------------------------
@jax.jit
def attention_forward(hidden_states, params):
    """hidden_states: (B, SEQ, HIDDEN). Returns (attention_output, weights=None) (vis=False)."""
    b, s, h = hidden_states.shape
    nh, hd = NUM_HEADS, HEAD_DIM

    # Host-side (one-time, free) re-layout of the weights to head-major so the kernel never
    # slices the lane dimension: wq_r[h] == wq[:, h*hd:(h+1)*hd], wo_r[h] == wo[h*hd:(h+1)*hd, :].
    wq = params["wq"].reshape(h, nh, hd).transpose(1, 0, 2)
    wk = params["wk"].reshape(h, nh, hd).transpose(1, 0, 2)
    wv = params["wv"].reshape(h, nh, hd).transpose(1, 0, 2)
    bq = params["bq"].reshape(nh, 1, hd)
    bk = params["bk"].reshape(nh, 1, hd)
    bv = params["bv"].reshape(nh, 1, hd)
    wo = params["wo"].reshape(nh, hd, h)
    bo = params["bo"].reshape(1, h)

    x2 = hidden_states.reshape(b * s, h)              # fold batch into M
    args = (x2, wq, bq, wk, bk, wv, bv, wo, bo)

    kernel = functools.partial(_attention_kernel, batch=b, seq=s,
                               num_heads=nh, head_dim=hd)

    out = pl.pallas_call(
        kernel,
        out_shape=jax.ShapeDtypeStruct((b * s, h), jnp.float32),
        in_specs=[pl.BlockSpec(memory_space=pltpu.MemorySpace.VMEM) for _ in args],
        out_specs=pl.BlockSpec(memory_space=pltpu.MemorySpace.VMEM),
    )(*args)

    # vis=False path of the PyTorch module: no attention probabilities returned.
    # attn_dropout / proj_dropout are identity at inference.
    return out.reshape(b, s, h), None


# --------------------------------- pure-JAX reference path ------------------------------------
def reference_attention(hidden_states, params):
    b, s, h = hidden_states.shape
    nh, hd = NUM_HEADS, HEAD_DIM
    q = hidden_states @ params["wq"] + params["bq"]
    k = hidden_states @ params["wk"] + params["bk"]
    v = hidden_states @ params["wv"] + params["bv"]

    def split(t):
        return t.reshape(b, s, nh, hd).transpose(0, 2, 1, 3)

    q, k, v = split(q), split(k), split(v)
    scores = jnp.einsum("bhqd,bhkd->bhqk", q, k) / jnp.sqrt(jnp.float32(hd))
    probs = jax.nn.softmax(scores, axis=-1)
    ctx = jnp.einsum("bhqk,bhkd->bhqd", probs, v).transpose(0, 2, 1, 3).reshape(b, s, h)
    return ctx @ params["wo"] + params["bo"]


# ----------------------------------------- init / main ----------------------------------------
def init_params(key):
    ks = jax.random.split(key, 8)

    def rnd(k, shape, scale=0.1):
        return scale * jax.random.normal(k, shape, jnp.float32)

    return dict(
        wq=rnd(ks[0], (HIDDEN, HIDDEN)), bq=rnd(ks[1], (HIDDEN,)),
        wk=rnd(ks[2], (HIDDEN, HIDDEN)), bk=rnd(ks[3], (HIDDEN,)),
        wv=rnd(ks[4], (HIDDEN, HIDDEN)), bv=rnd(ks[5], (HIDDEN,)),
        wo=rnd(ks[6], (HIDDEN, HIDDEN)), bo=rnd(ks[7], (HIDDEN,)),
    )


if __name__ == "__main__":
    key = jax.random.PRNGKey(0)
    k_params, k_x = jax.random.split(key)
    params = init_params(k_params)

    hidden_states = jax.random.normal(k_x, (B, SEQ, HIDDEN), jnp.float32)

    out, weights = attention_forward(hidden_states, params)
    out = jax.block_until_ready(out)

    ref = reference_attention(hidden_states, params)
    assert out.shape == (B, SEQ, HIDDEN)
    assert weights is None
    assert jnp.allclose(out, ref, atol=2e-3, rtol=2e-3), float(jnp.max(jnp.abs(out - ref)))

    print("KERNEL_OK")
</pallas_src>

<mosaic_0001>
module attributes {stable_mosaic.version = 11 : i64} {
  func.func @_attention_kernel(%arg0: memref<32x32xf32, #tpu.memory_space<vmem>>, %arg1: memref<4x32x8xf32, #tpu.memory_space<vmem>>, %arg2: memref<4x1x8xf32, #tpu.memory_space<vmem>>, %arg3: memref<4x32x8xf32, #tpu.memory_space<vmem>>, %arg4: memref<4x1x8xf32, #tpu.memory_space<vmem>>, %arg5: memref<4x32x8xf32, #tpu.memory_space<vmem>>, %arg6: memref<4x1x8xf32, #tpu.memory_space<vmem>>, %arg7: memref<4x8x32xf32, #tpu.memory_space<vmem>>, %arg8: memref<1x32xf32, #tpu.memory_space<vmem>>, %arg9: memref<32x32xf32, #tpu.memory_space<vmem>>) attributes {dimension_semantics = [], scalar_prefetch = 0 : i64, scratch_operands = 0 : i64, tpu.core_type = #tpu.core_type<tc>} {
    %c0 = arith.constant 0 : index
    %c0_0 = arith.constant 0 : index
    %0 = vector.load %arg0[%c0, %c0_0] : memref<32x32xf32, #tpu.memory_space<vmem>>, vector<32x32xf32>
    %c0_1 = arith.constant 0 : index
    %c0_2 = arith.constant 0 : index
    %c0_3 = arith.constant 0 : index
    %1 = vector.load %arg1[%c0_1, %c0_2, %c0_3] : memref<4x32x8xf32, #tpu.memory_space<vmem>>, vector<1x32x8xf32>
    %2 = vector.shape_cast %1 : vector<1x32x8xf32> to vector<32x8xf32>
    %cst = arith.constant dense<0.000000e+00> : vector<32x8xf32>
    %3 = tpu.matmul %0, %2, %cst {dimension_numbers = #tpu.dot_dimension_numbers<[1], [0], [0], [1], [0, 0, 1, 1], [], []>} : vector<32x32xf32>, vector<32x8xf32>, vector<32x8xf32> -> vector<32x8xf32>
    %c0_4 = arith.constant 0 : index
    %c0_5 = arith.constant 0 : index
    %c0_6 = arith.constant 0 : index
    %4 = vector.load %arg2[%c0_4, %c0_5, %c0_6] : memref<4x1x8xf32, #tpu.memory_space<vmem>>, vector<1x1x8xf32>
    %5 = vector.shape_cast %4 : vector<1x1x8xf32> to vector<1x8xf32>
    %6 = vector.broadcast %5 : vector<1x8xf32> to vector<32x8xf32>
    %7 = arith.addf %3, %6 : vector<32x8xf32>
    %c0_7 = arith.constant 0 : index
    %c0_8 = arith.constant 0 : index
    %c0_9 = arith.constant 0 : index
    %8 = vector.load %arg3[%c0_7, %c0_8, %c0_9] : memref<4x32x8xf32, #tpu.memory_space<vmem>>, vector<1x32x8xf32>
    %9 = vector.shape_cast %8 : vector<1x32x8xf32> to vector<32x8xf32>
    %cst_10 = arith.constant dense<0.000000e+00> : vector<32x8xf32>
    %10 = tpu.matmul %0, %9, %cst_10 {dimension_numbers = #tpu.dot_dimension_numbers<[1], [0], [0], [1], [0, 0, 1, 1], [], []>} : vector<32x32xf32>, vector<32x8xf32>, vector<32x8xf32> -> vector<32x8xf32>
    %c0_11 = arith.constant 0 : index
    %c0_12 = arith.constant 0 : index
    %c0_13 = arith.constant 0 : index
    %11 = vector.load %arg4[%c0_11, %c0_12, %c0_13] : memref<4x1x8xf32, #tpu.memory_space<vmem>>, vector<1x1x8xf32>
    %12 = vector.shape_cast %11 : vector<1x1x8xf32> to vector<1x8xf32>
    %13 = vector.broadcast %12 : vector<1x8xf32> to vector<32x8xf32>
    %14 = arith.addf %10, %13 : vector<32x8xf32>
    %c0_14 = arith.constant 0 : index
    %c0_15 = arith.constant 0 : index
    %c0_16 = arith.constant 0 : index
    %15 = vector.load %arg5[%c0_14, %c0_15, %c0_16] : memref<4x32x8xf32, #tpu.memory_space<vmem>>, vector<1x32x8xf32>
    %16 = vector.shape_cast %15 : vector<1x32x8xf32> to vector<32x8xf32>
    %cst_17 = arith.constant dense<0.000000e+00> : vector<32x8xf32>
    %17 = tpu.matmul %0, %16, %cst_17 {dimension_numbers = #tpu.dot_dimension_numbers<[1], [0], [0], [1], [0, 0, 1, 1], [], []>} : vector<32x32xf32>, vector<32x8xf32>, vector<32x8xf32> -> vector<32x8xf32>
    %c0_18 = arith.constant 0 : index
    %c0_19 = arith.constant 0 : index
    %c0_20 = arith.constant 0 : index
    %18 = vector.load %arg6[%c0_18, %c0_19, %c0_20] : memref<4x1x8xf32, #tpu.memory_space<vmem>>, vector<1x1x8xf32>
    %19 = vector.shape_cast %18 : vector<1x1x8xf32> to vector<1x8xf32>
    %20 = vector.broadcast %19 : vector<1x8xf32> to vector<32x8xf32>
    %21 = arith.addf %17, %20 : vector<32x8xf32>
    %22 = vector.shape_cast %7 : vector<32x8xf32> to vector<2x16x8xf32>
    %23 = vector.shape_cast %14 : vector<32x8xf32> to vector<2x16x8xf32>
    %24 = vector.shape_cast %21 : vector<32x8xf32> to vector<2x16x8xf32>
    "tpu.trace_start"() <{level = 10 : i32, message = "bqd,bkd->bqk"}> : () -> ()
    %cst_21 = arith.constant dense<0.000000e+00> : vector<2x16x16xf32>
    %25 = tpu.matmul %22, %23, %cst_21 {dimension_numbers = #tpu.dot_dimension_numbers<[2], [2], [1], [1], [0, 0, 0, 1, 1, 1], [0], [0]>} : vector<2x16x8xf32>, vector<2x16x8xf32>, vector<2x16x16xf32> -> vector<2x16x16xf32>
    "tpu.trace_stop"() : () -> ()
    %cst_22 = arith.constant 0.353553385 : f32
    %26 = vector.broadcast %cst_22 : f32 to vector<2x16x16xf32>
    %27 = arith.mulf %25, %26 : vector<2x16x16xf32>
    %cst_23 = arith.constant dense<0xFF800000> : vector<2x16xf32>
    %28 = vector.multi_reduction <maximumf>, %27, %cst_23 [2] : vector<2x16x16xf32> to vector<2x16xf32>
    %29 = vector.shape_cast %28 : vector<2x16xf32> to vector<2x16x1xf32>
    %30 = vector.broadcast %29 : vector<2x16x1xf32> to vector<2x16x16xf32>
    %31 = arith.subf %27, %30 : vector<2x16x16xf32>
    %32 = math.exp %31 : vector<2x16x16xf32>
    %cst_24 = arith.constant dense<0.000000e+00> : vector<2x16xf32>
    %33 = vector.multi_reduction <add>, %32, %cst_24 [2] : vector<2x16x16xf32> to vector<2x16xf32>
    %34 = vector.shape_cast %33 : vector<2x16xf32> to vector<2x16x1xf32>
    %35 = tpu.reciprocal %34 {approx = true} : vector<2x16x1xf32> -> vector<2x16x1xf32>
    %36 = vector.broadcast %35 : vector<2x16x1xf32> to vector<2x16x16xf32>
    %37 = arith.mulf %32, %36 : vector<2x16x16xf32>
    "tpu.trace_start"() <{level = 10 : i32, message = "bqk,bkd->bqd"}> : () -> ()
    %cst_25 = arith.constant dense<0.000000e+00> : vector<2x16x8xf32>
    %38 = tpu.matmul %37, %24, %cst_25 {dimension_numbers = #tpu.dot_dimension_numbers<[2], [1], [1], [2], [0, 0, 0, 1, 1, 2], [0], [0]>} : vector<2x16x16xf32>, vector<2x16x8xf32>, vector<2x16x8xf32> -> vector<2x16x8xf32>
    "tpu.trace_stop"() : () -> ()
    %39 = vector.shape_cast %38 : vector<2x16x8xf32> to vector<32x8xf32>
    %c0_26 = arith.constant 0 : index
    %c0_27 = arith.constant 0 : index
    %c0_28 = arith.constant 0 : index
    %40 = vector.load %arg7[%c0_26, %c0_27, %c0_28] : memref<4x8x32xf32, #tpu.memory_space<vmem>>, vector<1x8x32xf32>
    %41 = vector.shape_cast %40 : vector<1x8x32xf32> to vector<8x32xf32>
    %cst_29 = arith.constant dense<0.000000e+00> : vector<32x32xf32>
    %42 = tpu.matmul %39, %41, %cst_29 {dimension_numbers = #tpu.dot_dimension_numbers<[1], [0], [0], [1], [0, 0, 1, 1], [], []>} : vector<32x8xf32>, vector<8x32xf32>, vector<32x32xf32> -> vector<32x32xf32>
    %c1 = arith.constant 1 : index
    %c0_30 = arith.constant 0 : index
    %c0_31 = arith.constant 0 : index
    %43 = vector.load %arg1[%c1, %c0_30, %c0_31] : memref<4x32x8xf32, #tpu.memory_space<vmem>>, vector<1x32x8xf32>
    %44 = vector.shape_cast %43 : vector<1x32x8xf32> to vector<32x8xf32>
    %cst_32 = arith.constant dense<0.000000e+00> : vector<32x8xf32>
    %45 = tpu.matmul %0, %44, %cst_32 {dimension_numbers = #tpu.dot_dimension_numbers<[1], [0], [0], [1], [0, 0, 1, 1], [], []>} : vector<32x32xf32>, vector<32x8xf32>, vector<32x8xf32> -> vector<32x8xf32>
    %c1_33 = arith.constant 1 : index
    %c0_34 = arith.constant 0 : index
    %c0_35 = arith.constant 0 : index
    %46 = vector.load %arg2[%c1_33, %c0_34, %c0_35] : memref<4x1x8xf32, #tpu.memory_space<vmem>>, vector<1x1x8xf32>
    %47 = vector.shape_cast %46 : vector<1x1x8xf32> to vector<1x8xf32>
    %48 = vector.broadcast %47 : vector<1x8xf32> to vector<32x8xf32>
    %49 = arith.addf %45, %48 : vector<32x8xf32>
    %c1_36 = arith.constant 1 : index
    %c0_37 = arith.constant 0 : index
    %c0_38 = arith.constant 0 : index
    %50 = vector.load %arg3[%c1_36, %c0_37, %c0_38] : memref<4x32x8xf32, #tpu.memory_space<vmem>>, vector<1x32x8xf32>
    %51 = vector.shape_cast %50 : vector<1x32x8xf32> to vector<32x8xf32>
    %cst_39 = arith.constant dense<0.000000e+00> : vector<32x8xf32>
    %52 = tpu.matmul %0, %51, %cst_39 {dimension_numbers = #tpu.dot_dimension_numbers<[1], [0], [0], [1], [0, 0, 1, 1], [], []>} : vector<32x32xf32>, vector<32x8xf32>, vector<32x8xf32> -> vector<32x8xf32>
    %c1_40 = arith.constant 1 : index
    %c0_41 = arith.constant 0 : index
    %c0_42 = arith.constant 0 : index
    %53 = vector.load %arg4[%c1_40, %c0_41, %c0_42] : memref<4x1x8xf32, #tpu.memory_space<vmem>>, vector<1x1x8xf32>
    %54 = vector.shape_cast %53 : vector<1x1x8xf32> to vector<1x8xf32>
    %55 = vector.broadcast %54 : vector<1x8xf32> to vector<32x8xf32>
    %56 = arith.addf %52, %55 : vector<32x8xf32>
    %c1_43 = arith.constant 1 : index
    %c0_44 = arith.constant 0 : index
    %c0_45 = arith.constant 0 : index
    %57 = vector.load %arg5[%c1_43, %c0_44, %c0_45] : memref<4x32x8xf32, #tpu.memory_space<vmem>>, vector<1x32x8xf32>
    %58 = vector.shape_cast %57 : vector<1x32x8xf32> to vector<32x8xf32>
    %cst_46 = arith.constant dense<0.000000e+00> : vector<32x8xf32>
    %59 = tpu.matmul %0, %58, %cst_46 {dimension_numbers = #tpu.dot_dimension_numbers<[1], [0], [0], [1], [0, 0, 1, 1], [], []>} : vector<32x32xf32>, vector<32x8xf32>, vector<32x8xf32> -> vector<32x8xf32>
    %c1_47 = arith.constant 1 : index
    %c0_48 = arith.constant 0 : index
    %c0_49 = arith.constant 0 : index
    %60 = vector.load %arg6[%c1_47, %c0_48, %c0_49] : memref<4x1x8xf32, #tpu.memory_space<vmem>>, vector<1x1x8xf32>
    %61 = vector.shape_cast %60 : vector<1x1x8xf32> to vector<1x8xf32>
    %62 = vector.broadcast %61 : vector<1x8xf32> to vector<32x8xf32>
    %63 = arith.addf %59, %62 : vector<32x8xf32>
    %64 = vector.shape_cast %49 : vector<32x8xf32> to vector<2x16x8xf32>
    %65 = vector.shape_cast %56 : vector<32x8xf32> to vector<2x16x8xf32>
    %66 = vector.shape_cast %63 : vector<32x8xf32> to vector<2x16x8xf32>
    "tpu.trace_start"() <{level = 10 : i32, message = "bqd,bkd->bqk"}> : () -> ()
    %cst_50 = arith.constant dense<0.000000e+00> : vector<2x16x16xf32>
    %67 = tpu.matmul %64, %65, %cst_50 {dimension_numbers = #tpu.dot_dimension_numbers<[2], [2], [1], [1], [0, 0, 0, 1, 1, 1], [0], [0]>} : vector<2x16x8xf32>, vector<2x16x8xf32>, vector<2x16x16xf32> -> vector<2x16x16xf32>
    "tpu.trace_stop"() : () -> ()
    %cst_51 = arith.constant 0.353553385 : f32
    %68 = vector.broadcast %cst_51 : f32 to vector<2x16x16xf32>
    %69 = arith.mulf %67, %68 : vector<2x16x16xf32>
    %cst_52 = arith.constant dense<0xFF800000> : vector<2x16xf32>
    %70 = vector.multi_reduction <maximumf>, %69, %cst_52 [2] : vector<2x16x16xf32> to vector<2x16xf32>
    %71 = vector.shape_cast %70 : vector<2x16xf32> to vector<2x16x1xf32>
    %72 = vector.broadcast %71 : vector<2x16x1xf32> to vector<2x16x16xf32>
    %73 = arith.subf %69, %72 : vector<2x16x16xf32>
    %74 = math.exp %73 : vector<2x16x16xf32>
    %cst_53 = arith.constant dense<0.000000e+00> : vector<2x16xf32>
    %75 = vector.multi_reduction <add>, %74, %cst_53 [2] : vector<2x16x16xf32> to vector<2x16xf32>
    %76 = vector.shape_cast %75 : vector<2x16xf32> to vector<2x16x1xf32>
    %77 = tpu.reciprocal %76 {approx = true} : vector<2x16x1xf32> -> vector<2x16x1xf32>
    %78 = vector.broadcast %77 : vector<2x16x1xf32> to vector<2x16x16xf32>
    %79 = arith.mulf %74, %78 : vector<2x16x16xf32>
    "tpu.trace_start"() <{level = 10 : i32, message = "bqk,bkd->bqd"}> : () -> ()
    %cst_54 = arith.constant dense<0.000000e+00> : vector<2x16x8xf32>
    %80 = tpu.matmul %79, %66, %cst_54 {dimension_numbers = #tpu.dot_dimension_numbers<[2], [1], [1], [2], [0, 0, 0, 1, 1, 2], [0], [0]>} : vector<2x16x16xf32>, vector<2x16x8xf32>, vector<2x16x8xf32> -> vector<2x16x8xf32>
    "tpu.trace_stop"() : () -> ()
    %81 = vector.shape_cast %80 : vector<2x16x8xf32> to vector<32x8xf32>
    %c1_55 = arith.constant 1 : index
    %c0_56 = arith.constant 0 : index
    %c0_57 = arith.constant 0 : index
    %82 = vector.load %arg7[%c1_55, %c0_56, %c0_57] : memref<4x8x32xf32, #tpu.memory_space<vmem>>, vector<1x8x32xf32>
    %83 = vector.shape_cast %82 : vector<1x8x32xf32> to vector<8x32xf32>
    %cst_58 = arith.constant dense<0.000000e+00> : vector<32x32xf32>
    %84 = tpu.matmul %81, %83, %cst_58 {dimension_numbers = #tpu.dot_dimension_numbers<[1], [0], [0], [1], [0, 0, 1, 1], [], []>} : vector<32x8xf32>, vector<8x32xf32>, vector<32x32xf32> -> vector<32x32xf32>
    %85 = arith.addf %42, %84 : vector<32x32xf32>
    %c2 = arith.constant 2 : index
    %c0_59 = arith.constant 0 : index
    %c0_60 = arith.constant 0 : index
    %86 = vector.load %arg1[%c2, %c0_59, %c0_60] : memref<4x32x8xf32, #tpu.memory_space<vmem>>, vector<1x32x8xf32>
    %87 = vector.shape_cast %86 : vector<1x32x8xf32> to vector<32x8xf32>
    %cst_61 = arith.constant dense<0.000000e+00> : vector<32x8xf32>
    %88 = tpu.matmul %0, %87, %cst_61 {dimension_numbers = #tpu.dot_dimension_numbers<[1], [0], [0], [1], [0, 0, 1, 1], [], []>} : vector<32x32xf32>, vector<32x8xf32>, vector<32x8xf32> -> vector<32x8xf32>
    %c2_62 = arith.constant 2 : index
    %c0_63 = arith.constant 0 : index
    %c0_64 = arith.constant 0 : index
    %89 = vector.load %arg2[%c2_62, %c0_63, %c0_64] : memref<4x1x8xf32, #tpu.memory_space<vmem>>, vector<1x1x8xf32>
    %90 = vector.shape_cast %89 : vector<1x1x8xf32> to vector<1x8xf32>
    %91 = vector.broadcast %90 : vector<1x8xf32> to vector<32x8xf32>
    %92 = arith.addf %88, %91 : vector<32x8xf32>
    %c2_65 = arith.constant 2 : index
    %c0_66 = arith.constant 0 : index
    %c0_67 = arith.constant 0 : index
    %93 = vector.load %arg3[%c2_65, %c0_66, %c0_67] : memref<4x32x8xf32, #tpu.memory_space<vmem>>, vector<1x32x8xf32>
    %94 = vector.shape_cast %93 : vector<1x32x8xf32> to vector<32x8xf32>
    %cst_68 = arith.constant dense<0.000000e+00> : vector<32x8xf32>
    %95 = tpu.matmul %0, %94, %cst_68 {dimension_numbers = #tpu.dot_dimension_numbers<[1], [0], [0], [1], [0, 0, 1, 1], [], []>} : vector<32x32xf32>, vector<32x8xf32>, vector<32x8xf32> -> vector<32x8xf32>
    %c2_69 = arith.constant 2 : index
    %c0_70 = arith.constant 0 : index
    %c0_71 = arith.constant 0 : index
    %96 = vector.load %arg4[%c2_69, %c0_70, %c0_71] : memref<4x1x8xf32, #tpu.memory_space<vmem>>, vector<1x1x8xf32>
    %97 = vector.shape_cast %96 : vector<1x1x8xf32> to vector<1x8xf32>
    %98 = vector.broadcast %97 : vector<1x8xf32> to vector<32x8xf32>
    %99 = arith.addf %95, %98 : vector<32x8xf32>
    %c2_72 = arith.constant 2 : index
    %c0_73 = arith.constant 0 : index
    %c0_74 = arith.constant 0 : index
    %100 = vector.load %arg5[%c2_72, %c0_73, %c0_74] : memref<4x32x8xf32, #tpu.memory_space<vmem>>, vector<1x32x8xf32>
    %101 = vector.shape_cast %100 : vector<1x32x8xf32> to vector<32x8xf32>
    %cst_75 = arith.constant dense<0.000000e+00> : vector<32x8xf32>
    %102 = tpu.matmul %0, %101, %cst_75 {dimension_numbers = #tpu.dot_dimension_numbers<[1], [0], [0], [1], [0, 0, 1, 1], [], []>} : vector<32x32xf32>, vector<32x8xf32>, vector<32x8xf32> -> vector<32x8xf32>
    %c2_76 = arith.constant 2 : index
    %c0_77 = arith.constant 0 : index
    %c0_78 = arith.constant 0 : index
    %103 = vector.load %arg6[%c2_76, %c0_77, %c0_78] : memref<4x1x8xf32, #tpu.memory_space<vmem>>, vector<1x1x8xf32>
    %104 = vector.shape_cast %103 : vector<1x1x8xf32> to vector<1x8xf32>
    %105 = vector.broadcast %104 : vector<1x8xf32> to vector<32x8xf32>
    %106 = arith.addf %102, %105 : vector<32x8xf32>
    %107 = vector.shape_cast %92 : vector<32x8xf32> to vector<2x16x8xf32>
    %108 = vector.shape_cast %99 : vector<32x8xf32> to vector<2x16x8xf32>
    %109 = vector.shape_cast %106 : vector<32x8xf32> to vector<2x16x8xf32>
    "tpu.trace_start"() <{level = 10 : i32, message = "bqd,bkd->bqk"}> : () -> ()
    %cst_79 = arith.constant dense<0.000000e+00> : vector<2x16x16xf32>
    %110 = tpu.matmul %107, %108, %cst_79 {dimension_numbers = #tpu.dot_dimension_numbers<[2], [2], [1], [1], [0, 0, 0, 1, 1, 1], [0], [0]>} : vector<2x16x8xf32>, vector<2x16x8xf32>, vector<2x16x16xf32> -> vector<2x16x16xf32>
    "tpu.trace_stop"() : () -> ()
    %cst_80 = arith.constant 0.353553385 : f32
    %111 = vector.broadcast %cst_80 : f32 to vector<2x16x16xf32>
    %112 = arith.mulf %110, %111 : vector<2x16x16xf32>
    %cst_81 = arith.constant dense<0xFF800000> : vector<2x16xf32>
    %113 = vector.multi_reduction <maximumf>, %112, %cst_81 [2] : vector<2x16x16xf32> to vector<2x16xf32>
    %114 = vector.shape_cast %113 : vector<2x16xf32> to vector<2x16x1xf32>
    %115 = vector.broadcast %114 : vector<2x16x1xf32> to vector<2x16x16xf32>
    %116 = arith.subf %112, %115 : vector<2x16x16xf32>
    %117 = math.exp %116 : vector<2x16x16xf32>
    %cst_82 = arith.constant dense<0.000000e+00> : vector<2x16xf32>
    %118 = vector.multi_reduction <add>, %117, %cst_82 [2] : vector<2x16x16xf32> to vector<2x16xf32>
    %119 = vector.shape_cast %118 : vector<2x16xf32> to vector<2x16x1xf32>
    %120 = tpu.reciprocal %119 {approx = true} : vector<2x16x1xf32> -> vector<2x16x1xf32>
    %121 = vector.broadcast %120 : vector<2x16x1xf32> to vector<2x16x16xf32>
    %122 = arith.mulf %117, %121 : vector<2x16x16xf32>
    "tpu.trace_start"() <{level = 10 : i32, message = "bqk,bkd->bqd"}> : () -> ()
    %cst_83 = arith.constant dense<0.000000e+00> : vector<2x16x8xf32>
    %123 = tpu.matmul %122, %109, %cst_83 {dimension_numbers = #tpu.dot_dimension_numbers<[2], [1], [1], [2], [0, 0, 0, 1, 1, 2], [0], [0]>} : vector<2x16x16xf32>, vector<2x16x8xf32>, vector<2x16x8xf32> -> vector<2x16x8xf32>
    "tpu.trace_stop"() : () -> ()
    %124 = vector.shape_cast %123 : vector<2x16x8xf32> to vector<32x8xf32>
    %c2_84 = arith.constant 2 : index
    %c0_85 = arith.constant 0 : index
    %c0_86 = arith.constant 0 : index
    %125 = vector.load %arg7[%c2_84, %c0_85, %c0_86] : memref<4x8x32xf32, #tpu.memory_space<vmem>>, vector<1x8x32xf32>
    %126 = vector.shape_cast %125 : vector<1x8x32xf32> to vector<8x32xf32>
    %cst_87 = arith.constant dense<0.000000e+00> : vector<32x32xf32>
    %127 = tpu.matmul %124, %126, %cst_87 {dimension_numbers = #tpu.dot_dimension_numbers<[1], [0], [0], [1], [0, 0, 1, 1], [], []>} : vector<32x8xf32>, vector<8x32xf32>, vector<32x32xf32> -> vector<32x32xf32>
    %128 = arith.addf %85, %127 : vector<32x32xf32>
    %c3 = arith.constant 3 : index
    %c0_88 = arith.constant 0 : index
    %c0_89 = arith.constant 0 : index
    %129 = vector.load %arg1[%c3, %c0_88, %c0_89] : memref<4x32x8xf32, #tpu.memory_space<vmem>>, vector<1x32x8xf32>
    %130 = vector.shape_cast %129 : vector<1x32x8xf32> to vector<32x8xf32>
    %cst_90 = arith.constant dense<0.000000e+00> : vector<32x8xf32>
    %131 = tpu.matmul %0, %130, %cst_90 {dimension_numbers = #tpu.dot_dimension_numbers<[1], [0], [0], [1], [0, 0, 1, 1], [], []>} : vector<32x32xf32>, vector<32x8xf32>, vector<32x8xf32> -> vector<32x8xf32>
    %c3_91 = arith.constant 3 : index
    %c0_92 = arith.constant 0 : index
    %c0_93 = arith.constant 0 : index
    %132 = vector.load %arg2[%c3_91, %c0_92, %c0_93] : memref<4x1x8xf32, #tpu.memory_space<vmem>>, vector<1x1x8xf32>
    %133 = vector.shape_cast %132 : vector<1x1x8xf32> to vector<1x8xf32>
    %134 = vector.broadcast %133 : vector<1x8xf32> to vector<32x8xf32>
    %135 = arith.addf %131, %134 : vector<32x8xf32>
    %c3_94 = arith.constant 3 : index
    %c0_95 = arith.constant 0 : index
    %c0_96 = arith.constant 0 : index
    %136 = vector.load %arg3[%c3_94, %c0_95, %c0_96] : memref<4x32x8xf32, #tpu.memory_space<vmem>>, vector<1x32x8xf32>
    %137 = vector.shape_cast %136 : vector<1x32x8xf32> to vector<32x8xf32>
    %cst_97 = arith.constant dense<0.000000e+00> : vector<32x8xf32>
    %138 = tpu.matmul %0, %137, %cst_97 {dimension_numbers = #tpu.dot_dimension_numbers<[1], [0], [0], [1], [0, 0, 1, 1], [], []>} : vector<32x32xf32>, vector<32x8xf32>, vector<32x8xf32> -> vector<32x8xf32>
    %c3_98 = arith.constant 3 : index
    %c0_99 = arith.constant 0 : index
    %c0_100 = arith.constant 0 : index
    %139 = vector.load %arg4[%c3_98, %c0_99, %c0_100] : memref<4x1x8xf32, #tpu.memory_space<vmem>>, vector<1x1x8xf32>
    %140 = vector.shape_cast %139 : vector<1x1x8xf32> to vector<1x8xf32>
    %141 = vector.broadcast %140 : vector<1x8xf32> to vector<32x8xf32>
    %142 = arith.addf %138, %141 : vector<32x8xf32>
    %c3_101 = arith.constant 3 : index
    %c0_102 = arith.constant 0 : index
    %c0_103 = arith.constant 0 : index
    %143 = vector.load %arg5[%c3_101, %c0_102, %c0_103] : memref<4x32x8xf32, #tpu.memory_space<vmem>>, vector<1x32x8xf32>
    %144 = vector.shape_cast %143 : vector<1x32x8xf32> to vector<32x8xf32>
    %cst_104 = arith.constant dense<0.000000e+00> : vector<32x8xf32>
    %145 = tpu.matmul %0, %144, %cst_104 {dimension_numbers = #tpu.dot_dimension_numbers<[1], [0], [0], [1], [0, 0, 1, 1], [], []>} : vector<32x32xf32>, vector<32x8xf32>, vector<32x8xf32> -> vector<32x8xf32>
    %c3_105 = arith.constant 3 : index
    %c0_106 = arith.constant 0 : index
    %c0_107 = arith.constant 0 : index
    %146 = vector.load %arg6[%c3_105, %c0_106, %c0_107] : memref<4x1x8xf32, #tpu.memory_space<vmem>>, vector<1x1x8xf32>
    %147 = vector.shape_cast %146 : vector<1x1x8xf32> to vector<1x8xf32>
    %148 = vector.broadcast %147 : vector<1x8xf32> to vector<32x8xf32>
    %149 = arith.addf %145, %148 : vector<32x8xf32>
    %150 = vector.shape_cast %135 : vector<32x8xf32> to vector<2x16x8xf32>
    %151 = vector.shape_cast %142 : vector<32x8xf32> to vector<2x16x8xf32>
    %152 = vector.shape_cast %149 : vector<32x8xf32> to vector<2x16x8xf32>
    "tpu.trace_start"() <{level = 10 : i32, message = "bqd,bkd->bqk"}> : () -> ()
    %cst_108 = arith.constant dense<0.000000e+00> : vector<2x16x16xf32>
    %153 = tpu.matmul %150, %151, %cst_108 {dimension_numbers = #tpu.dot_dimension_numbers<[2], [2], [1], [1], [0, 0, 0, 1, 1, 1], [0], [0]>} : vector<2x16x8xf32>, vector<2x16x8xf32>, vector<2x16x16xf32> -> vector<2x16x16xf32>
    "tpu.trace_stop"() : () -> ()
    %cst_109 = arith.constant 0.353553385 : f32
    %154 = vector.broadcast %cst_109 : f32 to vector<2x16x16xf32>
    %155 = arith.mulf %153, %154 : vector<2x16x16xf32>
    %cst_110 = arith.constant dense<0xFF800000> : vector<2x16xf32>
    %156 = vector.multi_reduction <maximumf>, %155, %cst_110 [2] : vector<2x16x16xf32> to vector<2x16xf32>
    %157 = vector.shape_cast %156 : vector<2x16xf32> to vector<2x16x1xf32>
    %158 = vector.broadcast %157 : vector<2x16x1xf32> to vector<2x16x16xf32>
    %159 = arith.subf %155, %158 : vector<2x16x16xf32>
    %160 = math.exp %159 : vector<2x16x16xf32>
    %cst_111 = arith.constant dense<0.000000e+00> : vector<2x16xf32>
    %161 = vector.multi_reduction <add>, %160, %cst_111 [2] : vector<2x16x16xf32> to vector<2x16xf32>
    %162 = vector.shape_cast %161 : vector<2x16xf32> to vector<2x16x1xf32>
    %163 = tpu.reciprocal %162 {approx = true} : vector<2x16x1xf32> -> vector<2x16x1xf32>
    %164 = vector.broadcast %163 : vector<2x16x1xf32> to vector<2x16x16xf32>
    %165 = arith.mulf %160, %164 : vector<2x16x16xf32>
    "tpu.trace_start"() <{level = 10 : i32, message = "bqk,bkd->bqd"}> : () -> ()
    %cst_112 = arith.constant dense<0.000000e+00> : vector<2x16x8xf32>
    %166 = tpu.matmul %165, %152, %cst_112 {dimension_numbers = #tpu.dot_dimension_numbers<[2], [1], [1], [2], [0, 0, 0, 1, 1, 2], [0], [0]>} : vector<2x16x16xf32>, vector<2x16x8xf32>, vector<2x16x8xf32> -> vector<2x16x8xf32>
    "tpu.trace_stop"() : () -> ()
    %167 = vector.shape_cast %166 : vector<2x16x8xf32> to vector<32x8xf32>
    %c3_113 = arith.constant 3 : index
    %c0_114 = arith.constant 0 : index
    %c0_115 = arith.constant 0 : index
    %168 = vector.load %arg7[%c3_113, %c0_114, %c0_115] : memref<4x8x32xf32, #tpu.memory_space<vmem>>, vector<1x8x32xf32>
    %169 = vector.shape_cast %168 : vector<1x8x32xf32> to vector<8x32xf32>
    %cst_116 = arith.constant dense<0.000000e+00> : vector<32x32xf32>
    %170 = tpu.matmul %167, %169, %cst_116 {dimension_numbers = #tpu.dot_dimension_numbers<[1], [0], [0], [1], [0, 0, 1, 1], [], []>} : vector<32x8xf32>, vector<8x32xf32>, vector<32x32xf32> -> vector<32x32xf32>
    %171 = arith.addf %128, %170 : vector<32x32xf32>
    %c0_117 = arith.constant 0 : index
    %c0_118 = arith.constant 0 : index
    %172 = vector.load %arg8[%c0_117, %c0_118] : memref<1x32xf32, #tpu.memory_space<vmem>>, vector<1x32xf32>
    %173 = vector.broadcast %172 : vector<1x32xf32> to vector<32x32xf32>
    %174 = arith.addf %171, %173 : vector<32x32xf32>
    %c0_119 = arith.constant 0 : index
    %c0_120 = arith.constant 0 : index
    %175 = vector.load %arg9[%c0_119, %c0_120] : memref<32x32xf32, #tpu.memory_space<vmem>>, vector<32x32xf32>
    tpu.vector_store %arg9[%c0_119, %c0_120], %174 {strides = array<i32>} : memref<32x32xf32, #tpu.memory_space<vmem>>, vector<32x32xf32>,
    return
  }
}

</mosaic_0001>

<llo_original>
// kernel: attention_forward.1
$region0: #{attention_forward.1}
  #allocation0 [shape = 'u32[]', space=smem, size = 0x4, offset = 0x4, fixed_abs, tag = 'smem constant byte address 0x4 - core index']
  #allocation1 [shape = 'u32[72,128]{1,0:T(1,128)}', space=vmem, size = 0x9000, scoped, tag = 'internal scratch']
  %s0 = inlined_call_operand.vmem [shape: f32[32,32], index: 0, kind: input, shape index: {}]
  %s1 = inlined_call_operand.vmem [shape: f32[4,32,8], index: 1, kind: input, shape index: {}]
  %s2 = inlined_call_operand.vmem [shape: f32[4,1,8], index: 2, kind: input, shape index: {}]
  %s3 = inlined_call_operand.vmem [shape: f32[4,32,8], index: 3, kind: input, shape index: {}]
  %s4 = inlined_call_operand.vmem [shape: f32[4,1,8], index: 4, kind: input, shape index: {}]
  %s5 = inlined_call_operand.vmem [shape: f32[4,32,8], index: 5, kind: input, shape index: {}]
  %s6 = inlined_call_operand.vmem [shape: f32[4,1,8], index: 6, kind: input, shape index: {}]
  %s7 = inlined_call_operand.vmem [shape: f32[4,8,32], index: 7, kind: input, shape index: {}]
  %s8 = inlined_call_operand.vmem [shape: f32[1,32], index: 8, kind: input, shape index: {}]
  %s9 = inlined_call_operand.hbm [shape: f32[32,32], index: 9, kind: output, shape index: {}]
  %s10 = sld [smem:[#allocation0]]
  $region46: #{attention_forward.1} parent=0
    _
  %s12 = ssub.s32 1, %s10
  %s13 = scalar_select 0, %s12, %s10
  $region1: #{attention_forward.1} parent=0
    #allocation2 [shape = 'u8[16384]{0}', space=vmem, size = 0x4000, scoped, tag = 'output window, operand 0, single buffered']
    #allocation3 [shape = 's32[1]{0}', space=sflag, size = 0x4, scoped, tag = 'scoped memory for attention_forward.1']
    %14 = vsyncpa [#allocation3], 0
    // Predicated region
    $region2: #{attention_forward.1} parent=1 // pred_check
      _
    $region3: #{attention_forward.1} parent=1 // pred_check_branch
      %16 = sbr.rel (0) target = $region5
    $region4: #{attention_forward.1} parent=1 // pred_region
      _
    $region5: #{attention_forward.1} parent=1 // pred_fallthru
      _
    // Predicated region
    $region6: #{attention_forward.1} parent=1 // pred_check
      _
    $region7: #{attention_forward.1} parent=1 // pred_check_branch
      %18 = sbr.rel (0) target = $region9
    $region8: #{attention_forward.1} parent=1 // pred_region
      _
    $region9: #{attention_forward.1} parent=1 // pred_fallthru
      _
    // Predicated region
    $region10: #{attention_forward.1} parent=1 // pred_check
      _
    $region11: #{attention_forward.1} parent=1 // pred_check_branch
      %20 = sbr.rel (0) target = $region13
    $region12: #{attention_forward.1} parent=1 // pred_region
      _
    $region13: #{attention_forward.1} parent=1 // pred_fallthru
      _
    // Predicated region
    $region14: #{attention_forward.1} parent=1 // pred_check
      _
    $region15: #{attention_forward.1} parent=1 // pred_check_branch
      %22 = sbr.rel (0) target = $region17
    $region16: #{attention_forward.1} parent=1 // pred_region
      _
    $region17: #{attention_forward.1} parent=1 // pred_fallthru
      _
    // Predicated region
    $region18: #{attention_forward.1} parent=1 // pred_check
      _
    $region19: #{attention_forward.1} parent=1 // pred_check_branch
      %24 = sbr.rel (0) target = $region21
    $region20: #{attention_forward.1} parent=1 // pred_region
      _
    $region21: #{attention_forward.1} parent=1 // pred_fallthru
      _
    // Predicated region
    $region22: #{attention_forward.1} parent=1 // pred_check
      _
    $region23: #{attention_forward.1} parent=1 // pred_check_branch
      %26 = sbr.rel (0) target = $region25
    $region24: #{attention_forward.1} parent=1 // pred_region
      _
    $region25: #{attention_forward.1} parent=1 // pred_fallthru
      _
    // Predicated region
    $region26: #{attention_forward.1} parent=1 // pred_check
      _
    $region27: #{attention_forward.1} parent=1 // pred_check_branch
      %28 = sbr.rel (0) target = $region29
    $region28: #{attention_forward.1} parent=1 // pred_region
      _
    $region29: #{attention_forward.1} parent=1 // pred_fallthru
      _
    // Predicated region
    $region30: #{attention_forward.1} parent=1 // pred_check
      _
    $region31: #{attention_forward.1} parent=1 // pred_check_branch
      %30 = sbr.rel (0) target = $region33
    $region32: #{attention_forward.1} parent=1 // pred_region
      _
    $region33: #{attention_forward.1} parent=1 // pred_fallthru
      _
    // Predicated region
    $region34: #{attention_forward.1} parent=1 // pred_check
      _
    $region35: #{attention_forward.1} parent=1 // pred_check_branch
      %32 = sbr.rel (0) target = $region37
    $region36: #{attention_forward.1} parent=1 // pred_region
      _
    $region37: #{attention_forward.1} parent=1 // pred_fallthru
      _
    %v33 = vld [vmem:[%s0] sm:$0xff]
    %v34 = vld [vmem:[%s0 + $0x8] sm:$0xff]
    %v35 = vld [vmem:[%s0 + $0x10] sm:$0xff]
    %v36 = vld [vmem:[%s0 + $0x18] sm:$0xff]
    %v37 = vld [vmem:[%s1] sm:$0xff]
    %v38 = vld [vmem:[%s1 + $0x8] sm:$0xff]
    %v39 = vld [vmem:[%s1 + $0x10] sm:$0xff]
    %v40 = vld [vmem:[%s1 + $0x18] sm:$0xff]
    %v41 = vld [vmem:[%s2] sm:$0x1]
    %v43 = vperm.slane %v41, 0
    %vm45 = vcmask 261120
    %v47 = vsel %vm45, %v33, 0
    %v50 = vsel %vm45, %v34, 0
    %v53 = vsel %vm45, %v35, 0
    %v56 = vsel %vm45, %v36, 0
    %58 = vmatpush.msra.mxu0 0.0
    %59 = vmatpush.msra.mxu0 0.0
    %60 = vmatpush.msra.mxu0 0.0
    %61 = vmatpush.msra.mxu0 0.0
    %62 = vmatpush.msra.mxu0 0.0
    %63 = vmatpush.msra.mxu0 0.0
    %64 = vmatpush.msra.mxu0 0.0
    %65 = vmatpush.msra.mxu0 0.0
    %66 = vmatpush.msra.mxu0 0.0
    %67 = vmatpush.msra.mxu0 0.0
    %68 = vmatpush.msra.mxu0 0.0
    %69 = vmatpush.msra.mxu0 0.0
    %70 = vmatpush.msra.mxu0 %v40
    %71 = vmatpush.msra.mxu0 %v39
    %72 = vmatpush.msra.mxu0 %v38
    %73 = vmatpush.msra.mxu0 %v37
    %74 = vmatmul.f32.gmra.mxu0 %v47
    %v75 = vpop.f32.mrf.mxu0
    %v76 = vadd.f32 %v43, %v75
    %77 = vmatmul.f32.gmra.mxu0 %v50
    %v78 = vpop.f32.mrf.mxu0
    %v79 = vadd.f32 %v43, %v78
    %80 = vmatmul.f32.gmra.mxu0 %v53
    %v81 = vpop.f32.mrf.mxu0
    %v82 = vadd.f32 %v43, %v81
    %83 = vmatmul.f32.gmra.mxu0 %v56
    %v84 = vpop.f32.mrf.mxu0
    %v85 = vadd.f32 %v43, %v84
    %86 = vdwg.mxu0
    %v87 = vld [vmem:[%s3] sm:$0xff]
    %v88 = vld [vmem:[%s3 + $0x8] sm:$0xff]
    %v89 = vld [vmem:[%s3 + $0x10] sm:$0xff]
    %v90 = vld [vmem:[%s3 + $0x18] sm:$0xff]
    %v91 = vld [vmem:[%s4] sm:$0x1]
    %v93 = vperm.slane %v91, 0
    %95 = vmatpush.msra.mxu0 0.0
    %96 = vmatpush.msra.mxu0 0.0
    %97 = vmatpush.msra.mxu0 0.0
    %98 = vmatpush.msra.mxu0 0.0
    %99 = vmatpush.msra.mxu0 0.0
    %100 = vmatpush.msra.mxu0 0.0
    %101 = vmatpush.msra.mxu0 0.0
    %102 = vmatpush.msra.mxu0 0.0
    %103 = vmatpush.msra.mxu0 0.0
    %104 = vmatpush.msra.mxu0 0.0
    %105 = vmatpush.msra.mxu0 0.0
    %106 = vmatpush.msra.mxu0 0.0
    %107 = vmatpush.msra.mxu0 %v90
    %108 = vmatpush.msra.mxu0 %v89
    %109 = vmatpush.msra.mxu0 %v88
    %110 = vmatpush.msra.mxu0 %v87
    %111 = vmatmul.f32.gmra.mxu0 %v47
    %v112 = vpop.f32.mrf.mxu0
    %v113 = vadd.f32 %v93, %v112
    %114 = vmatmul.f32.gmra.mxu0 %v50
    %v115 = vpop.f32.mrf.mxu0
    %v116 = vadd.f32 %v93, %v115
    %117 = vmatmul.f32.gmra.mxu0 %v53
    %v118 = vpop.f32.mrf.mxu0
    %v119 = vadd.f32 %v93, %v118
    %120 = vmatmul.f32.gmra.mxu0 %v56
    %v121 = vpop.f32.mrf.mxu0
    %v122 = vadd.f32 %v93, %v121
    %123 = vdwg.mxu0
    %v124 = vld [vmem:[%s5] sm:$0xff]
    %v125 = vld [vmem:[%s5 + $0x8] sm:$0xff]
    %v126 = vld [vmem:[%s5 + $0x10] sm:$0xff]
    %v127 = vld [vmem:[%s5 + $0x18] sm:$0xff]
    %v128 = vld [vmem:[%s6] sm:$0x1]
    %v130 = vperm.slane %v128, 0
    %132 = vmatpush.msra.mxu0 0.0
    %133 = vmatpush.msra.mxu0 0.0
    %134 = vmatpush.msra.mxu0 0.0
    %135 = vmatpush.msra.mxu0 0.0
    %136 = vmatpush.msra.mxu0 0.0
    %137 = vmatpush.msra.mxu0 0.0
    %138 = vmatpush.msra.mxu0 0.0
    %139 = vmatpush.msra.mxu0 0.0
    %140 = vmatpush.msra.mxu0 0.0
    %141 = vmatpush.msra.mxu0 0.0
    %142 = vmatpush.msra.mxu0 0.0
    %143 = vmatpush.msra.mxu0 0.0
    %144 = vmatpush.msra.mxu0 %v127
    %145 = vmatpush.msra.mxu0 %v126
    %146 = vmatpush.msra.mxu0 %v125
    %147 = vmatpush.msra.mxu0 %v124
    %148 = vmatmul.f32.gmra.mxu0 %v47
    %v149 = vpop.f32.mrf.mxu0
    %v150 = vadd.f32 %v130, %v149
    %151 = vmatmul.f32.gmra.mxu0 %v50
    %v152 = vpop.f32.mrf.mxu0
    %v153 = vadd.f32 %v130, %v152
    %154 = vmatmul.f32.gmra.mxu0 %v53
    %v155 = vpop.f32.mrf.mxu0
    %v156 = vadd.f32 %v130, %v155
    %157 = vmatmul.f32.gmra.mxu0 %v56
    %v158 = vpop.f32.mrf.mxu0
    %v159 = vadd.f32 %v130, %v158
    %160 = vdwg.mxu0
    %vm161 = vcmask 64512
    %v163 = vsel %vm161, %v76, 0
    %v166 = vsel %vm161, %v79, 0
    %v169 = vsel %vm161, %v113, 0
    %v172 = vsel %vm161, %v116, 0
    %174 = vmatpush.xpose.msra.mxu0 0.0
    %175 = vmatpush.xpose.msra.mxu0 0.0
    %176 = vmatpush.xpose.msra.mxu0 0.0
    %177 = vmatpush.xpose.msra.mxu0 0.0
    %178 = vmatpush.xpose.msra.mxu0 0.0
    %179 = vmatpush.xpose.msra.mxu0 0.0
    %180 = vmatpush.xpose.msra.mxu0 0.0
    %181 = vmatpush.xpose.msra.mxu0 0.0
    %182 = vmatpush.xpose.msra.mxu0 0.0
    %183 = vmatpush.xpose.msra.mxu0 0.0
    %184 = vmatpush.xpose.msra.mxu0 0.0
    %185 = vmatpush.xpose.msra.mxu0 0.0
    %186 = vmatpush.xpose.msra.mxu0 0.0
    %187 = vmatpush.xpose.msra.mxu0 0.0
    %188 = vmatpush.xpose.msra.mxu0 %v172
    %189 = vmatpush.xpose.msra.mxu0 %v169
    %190 = vmatmul.f32.gmra.mxu0 %v163
    %v191 = vpop.f32.mrf.mxu0
    %v192 = vadd.f32 0.0, %v191
    %193 = vmatmul.f32.gmra.mxu0 %v166
    %v194 = vpop.f32.mrf.mxu0
    %v195 = vadd.f32 0.0, %v194
    %196 = vdwg.mxu0
    %v198 = vsel %vm161, %v82, 0
    %v201 = vsel %vm161, %v85, 0
    %v204 = vsel %vm161, %v119, 0
    %v207 = vsel %vm161, %v122, 0
    %209 = vmatpush.xpose.msra.mxu0 0.0
    %210 = vmatpush.xpose.msra.mxu0 0.0
    %211 = vmatpush.xpose.msra.mxu0 0.0
    %212 = vmatpush.xpose.msra.mxu0 0.0
    %213 = vmatpush.xpose.msra.mxu0 0.0
    %214 = vmatpush.xpose.msra.mxu0 0.0
    %215 = vmatpush.xpose.msra.mxu0 0.0
    %216 = vmatpush.xpose.msra.mxu0 0.0
    %217 = vmatpush.xpose.msra.mxu0 0.0
    %218 = vmatpush.xpose.msra.mxu0 0.0
    %219 = vmatpush.xpose.msra.mxu0 0.0
    %220 = vmatpush.xpose.msra.mxu0 0.0
    %221 = vmatpush.xpose.msra.mxu0 0.0
    %222 = vmatpush.xpose.msra.mxu0 0.0
    %223 = vmatpush.xpose.msra.mxu0 %v207
    %224 = vmatpush.xpose.msra.mxu0 %v204
    %225 = vmatmul.f32.gmra.mxu0 %v198
    %v226 = vpop.f32.mrf.mxu0
    %v227 = vadd.f32 0.0, %v226
    %228 = vmatmul.f32.gmra.mxu0 %v201
    %v229 = vpop.f32.mrf.mxu0
    %v230 = vadd.f32 0.0, %v229
    %231 = vdwg.mxu0
    %v232 = vmul.f32 %v192, 0.35355338
    %v233 = vmul.f32 %v195, 0.35355338
    %v234 = vmul.f32 %v227, 0.35355338
    %v235 = vmul.f32 %v230, 0.35355338
    %vm236 = vcmask 130048
    %v237 = vsel %vm236, %v232, -inf
    %238 = vmax.xlane.f32.xlu0 %v237
    %v239 = vpop.xlane.xlu0 %238
    %v240 = vsel %vm236, %v233, -inf
    %241 = vmax.xlane.f32.xlu0 %v240
    %v242 = vpop.xlane.xlu0 %241
    %v243 = vsel %vm236, %v234, -inf
    %244 = vmax.xlane.f32.xlu0 %v243
    %v245 = vpop.xlane.xlu0 %244
    %v246 = vsel %vm236, %v235, -inf
    %247 = vmax.xlane.f32.xlu0 %v246
    %v248 = vpop.xlane.xlu0 %247
    %v249 = vsub.f32 %v232, %v239
    %v250 = vsub.f32 %v233, %v242
    %v251 = vsub.f32 %v234, %v245
    %v252 = vsub.f32 %v235, %v248
    %v253 = vmul.f32 %v249, 1.442695
    %v254 = vpow.pop %v253
    %v255 = vmul.f32 %v250, 1.442695
    %v256 = vpow.pop %v255
    %v257 = vmul.f32 %v251, 1.442695
    %v258 = vpow.pop %v257
    %v259 = vmul.f32 %v252, 1.442695
    %v260 = vpow.pop %v259
    %v261 = vsel %vm236, %v254, 0.0
    %262 = vadd.xlane.f32.xlu0 %v261
    %v263 = vpop.xlane.xlu0 %262
    %v264 = vsel %vm236, %v256, 0.0
    %265 = vadd.xlane.f32.xlu0 %v264
    %v266 = vpop.xlane.xlu0 %265
    %v267 = vsel %vm236, %v258, 0.0
    %268 = vadd.xlane.f32.xlu0 %v267
    %v269 = vpop.xlane.xlu0 %268
    %v270 = vsel %vm236, %v260, 0.0
    %271 = vadd.xlane.f32.xlu0 %v270
    %v272 = vpop.xlane.xlu0 %271
    %v273 = vrcp.pop %v263
    %v274 = vrcp.pop %v266
    %v275 = vrcp.pop %v269
    %v276 = vrcp.pop %v272
    %v277 = vmul.f32 %v254, %v273
    %v278 = vmul.f32 %v256, %v274
    %v279 = vmul.f32 %v258, %v275
    %v280 = vmul.f32 %v260, %v276
    %v282 = vsel %vm236, %v277, 0
    %v285 = vsel %vm236, %v278, 0
    %287 = vmatpush.msra.mxu0 0.0
    %288 = vmatpush.msra.mxu0 0.0
    %289 = vmatpush.msra.mxu0 0.0
    %290 = vmatpush.msra.mxu0 0.0
    %291 = vmatpush.msra.mxu0 0.0
    %292 = vmatpush.msra.mxu0 0.0
    %293 = vmatpush.msra.mxu0 0.0
    %294 = vmatpush.msra.mxu0 0.0
    %295 = vmatpush.msra.mxu0 0.0
    %296 = vmatpush.msra.mxu0 0.0
    %297 = vmatpush.msra.mxu0 0.0
    %298 = vmatpush.msra.mxu0 0.0
    %299 = vmatpush.msra.mxu0 0.0
    %300 = vmatpush.msra.mxu0 0.0
    %301 = vmatpush.msra.mxu0 %v153
    %302 = vmatpush.msra.mxu0 %v150
    %303 = vmatmul.f32.gmra.mxu0 %v282
    %v304 = vpop.f32.mrf.mxu0
    %v305 = vadd.f32 0.0, %v304
    %306 = vmatmul.f32.gmra.mxu0 %v285
    %v307 = vpop.f32.mrf.mxu0
    %v308 = vadd.f32 0.0, %v307
    %309 = vdwg.mxu0
    %v311 = vsel %vm236, %v279, 0
    %v314 = vsel %vm236, %v280, 0
    %316 = vmatpush.msra.mxu0 0.0
    %317 = vmatpush.msra.mxu0 0.0
    %318 = vmatpush.msra.mxu0 0.0
    %319 = vmatpush.msra.mxu0 0.0
    %320 = vmatpush.msra.mxu0 0.0
    %321 = vmatpush.msra.mxu0 0.0
    %322 = vmatpush.msra.mxu0 0.0
    %323 = vmatpush.msra.mxu0 0.0
    %324 = vmatpush.msra.mxu0 0.0
    %325 = vmatpush.msra.mxu0 0.0
    %326 = vmatpush.msra.mxu0 0.0
    %327 = vmatpush.msra.mxu0 0.0
    %328 = vmatpush.msra.mxu0 0.0
    %329 = vmatpush.msra.mxu0 0.0
    %330 = vmatpush.msra.mxu0 %v159
    %331 = vmatpush.msra.mxu0 %v156
    %332 = vmatmul.f32.gmra.mxu0 %v311
    %v333 = vpop.f32.mrf.mxu0
    %v334 = vadd.f32 0.0, %v333
    %335 = vmatmul.f32.gmra.mxu0 %v314
    %v336 = vpop.f32.mrf.mxu0
    %v337 = vadd.f32 0.0, %v336
    %338 = vdwg.mxu0
    %v339 = vld [vmem:[%s7] sm:$0xff]
    %s340 = scalar_lea.vmem %s1, 32
    %v341 = vld [vmem:[%s340] sm:$0xff]
    %v342 = vld [vmem:[%s340 + $0x8] sm:$0xff]
    %v343 = vld [vmem:[%s340 + $0x10] sm:$0xff]
    %v344 = vld [vmem:[%s340 + $0x18] sm:$0xff]
    %s345 = scalar_lea.vmem %s2, 1
    %v346 = vld [vmem:[%s345] sm:$0x1]
    %v348 = vperm.slane %v346, 0
    %350 = vmatpush.msra.mxu0 0.0
    %351 = vmatpush.msra.mxu0 0.0
    %352 = vmatpush.msra.mxu0 0.0
    %353 = vmatpush.msra.mxu0 0.0
    %354 = vmatpush.msra.mxu0 0.0
    %355 = vmatpush.msra.mxu0 0.0
    %356 = vmatpush.msra.mxu0 0.0
    %357 = vmatpush.msra.mxu0 0.0
    %358 = vmatpush.msra.mxu0 0.0
    %359 = vmatpush.msra.mxu0 0.0
    %360 = vmatpush.msra.mxu0 0.0
    %361 = vmatpush.msra.mxu0 0.0
    %362 = vmatpush.msra.mxu0 %v344
    %363 = vmatpush.msra.mxu0 %v343
    %364 = vmatpush.msra.mxu0 %v342
    %365 = vmatpush.msra.mxu0 %v341
    %366 = vmatmul.f32.gmra.mxu0 %v47
    %v367 = vpop.f32.mrf.mxu0
    %v368 = vadd.f32 %v348, %v367
    %369 = vmatmul.f32.gmra.mxu0 %v50
    %v370 = vpop.f32.mrf.mxu0
    %v371 = vadd.f32 %v348, %v370
    %372 = vmatmul.f32.gmra.mxu0 %v53
    %v373 = vpop.f32.mrf.mxu0
    %v374 = vadd.f32 %v348, %v373
    %375 = vmatmul.f32.gmra.mxu0 %v56
    %v376 = vpop.f32.mrf.mxu0
    %v377 = vadd.f32 %v348, %v376
    %378 = vdwg.mxu0
    %s379 = scalar_lea.vmem %s3, 32
    %v380 = vld [vmem:[%s379] sm:$0xff]
    %v381 = vld [vmem:[%s379 + $0x8] sm:$0xff]
    %v382 = vld [vmem:[%s379 + $0x10] sm:$0xff]
    %v383 = vld [vmem:[%s379 + $0x18] sm:$0xff]
    %s384 = scalar_lea.vmem %s4, 1
    %v385 = vld [vmem:[%s384] sm:$0x1]
    %v387 = vperm.slane %v385, 0
    %389 = vmatpush.msra.mxu0 0.0
    %390 = vmatpush.msra.mxu0 0.0
    %391 = vmatpush.msra.mxu0 0.0
    %392 = vmatpush.msra.mxu0 0.0
    %393 = vmatpush.msra.mxu0 0.0
    %394 = vmatpush.msra.mxu0 0.0
    %395 = vmatpush.msra.mxu0 0.0
    %396 = vmatpush.msra.mxu0 0.0
    %397 = vmatpush.msra.mxu0 0.0
    %398 = vmatpush.msra.mxu0 0.0
    %399 = vmatpush.msra.mxu0 0.0
    %400 = vmatpush.msra.mxu0 0.0
    %401 = vmatpush.msra.mxu0 %v383
    %402 = vmatpush.msra.mxu0 %v382
    %403 = vmatpush.msra.mxu0 %v381
    %404 = vmatpush.msra.mxu0 %v380
    %405 = vmatmul.f32.gmra.mxu0 %v47
    %v406 = vpop.f32.mrf.mxu0
    %v407 = vadd.f32 %v387, %v406
    %408 = vmatmul.f32.gmra.mxu0 %v50
    %v409 = vpop.f32.mrf.mxu0
    %v410 = vadd.f32 %v387, %v409
    %411 = vmatmul.f32.gmra.mxu0 %v53
    %v412 = vpop.f32.mrf.mxu0
    %v413 = vadd.f32 %v387, %v412
    %414 = vmatmul.f32.gmra.mxu0 %v56
    %v415 = vpop.f32.mrf.mxu0
    %v416 = vadd.f32 %v387, %v415
    %417 = vdwg.mxu0
    %s418 = scalar_lea.vmem %s5, 32
    %v419 = vld [vmem:[%s418] sm:$0xff]
    %v420 = vld [vmem:[%s418 + $0x8] sm:$0xff]
    %v421 = vld [vmem:[%s418 + $0x10] sm:$0xff]
    %v422 = vld [vmem:[%s418 + $0x18] sm:$0xff]
    %s423 = scalar_lea.vmem %s6, 1
    %v424 = vld [vmem:[%s423] sm:$0x1]
    %v426 = vperm.slane %v424, 0
    %428 = vmatpush.msra.mxu0 0.0
    %429 = vmatpush.msra.mxu0 0.0
    %430 = vmatpush.msra.mxu0 0.0
    %431 = vmatpush.msra.mxu0 0.0
    %432 = vmatpush.msra.mxu0 0.0
    %433 = vmatpush.msra.mxu0 0.0
    %434 = vmatpush.msra.mxu0 0.0
    %435 = vmatpush.msra.mxu0 0.0
    %436 = vmatpush.msra.mxu0 0.0
    %437 = vmatpush.msra.mxu0 0.0
    %438 = vmatpush.msra.mxu0 0.0
    %439 = vmatpush.msra.mxu0 0.0
    %440 = vmatpush.msra.mxu0 %v422
    %441 = vmatpush.msra.mxu0 %v421
    %442 = vmatpush.msra.mxu0 %v420
    %443 = vmatpush.msra.mxu0 %v419
    %444 = vmatmul.f32.gmra.mxu0 %v47
    %v445 = vpop.f32.mrf.mxu0
    %v446 = vadd.f32 %v426, %v445
    %447 = vmatmul.f32.gmra.mxu0 %v50
    %v448 = vpop.f32.mrf.mxu0
    %v449 = vadd.f32 %v426, %v448
    %450 = vmatmul.f32.gmra.mxu0 %v53
    %v451 = vpop.f32.mrf.mxu0
    %v452 = vadd.f32 %v426, %v451
    %453 = vmatmul.f32.gmra.mxu0 %v56
    %v454 = vpop.f32.mrf.mxu0
    %v455 = vadd.f32 %v426, %v454
    %456 = vdwg.mxu0
    %v458 = vsel %vm161, %v368, 0
    %v461 = vsel %vm161, %v371, 0
    %v464 = vsel %vm161, %v407, 0
    %v467 = vsel %vm161, %v410, 0
    %469 = vmatpush.xpose.msra.mxu0 0.0
    %470 = vmatpush.xpose.msra.mxu0 0.0
    %471 = vmatpush.xpose.msra.mxu0 0.0
    %472 = vmatpush.xpose.msra.mxu0 0.0
    %473 = vmatpush.xpose.msra.mxu0 0.0
    %474 = vmatpush.xpose.msra.mxu0 0.0
    %475 = vmatpush.xpose.msra.mxu0 0.0
    %476 = vmatpush.xpose.msra.mxu0 0.0
    %477 = vmatpush.xpose.msra.mxu0 0.0
    %478 = vmatpush.xpose.msra.mxu0 0.0
    %479 = vmatpush.xpose.msra.mxu0 0.0
    %480 = vmatpush.xpose.msra.mxu0 0.0
    %481 = vmatpush.xpose.msra.mxu0 0.0
    %482 = vmatpush.xpose.msra.mxu0 0.0
    %483 = vmatpush.xpose.msra.mxu0 %v467
    %484 = vmatpush.xpose.msra.mxu0 %v464
    %485 = vmatmul.f32.gmra.mxu0 %v458
    %v486 = vpop.f32.mrf.mxu0
    %v487 = vadd.f32 0.0, %v486
    %488 = vmatmul.f32.gmra.mxu0 %v461
    %v489 = vpop.f32.mrf.mxu0
    %v490 = vadd.f32 0.0, %v489
    %491 = vdwg.mxu0
    %v493 = vsel %vm161, %v374, 0
    %v496 = vsel %vm161, %v377, 0
    %v499 = vsel %vm161, %v413, 0
    %v502 = vsel %vm161, %v416, 0
    %504 = vmatpush.xpose.msra.mxu0 0.0
    %505 = vmatpush.xpose.msra.mxu0 0.0
    %506 = vmatpush.xpose.msra.mxu0 0.0
    %507 = vmatpush.xpose.msra.mxu0 0.0
    %508 = vmatpush.xpose.msra.mxu0 0.0
    %509 = vmatpush.xpose.msra.mxu0 0.0
    %510 = vmatpush.xpose.msra.mxu0 0.0
    %511 = vmatpush.xpose.msra.mxu0 0.0
    %512 = vmatpush.xpose.msra.mxu0 0.0
    %513 = vmatpush.xpose.msra.mxu0 0.0
    %514 = vmatpush.xpose.msra.mxu0 0.0
    %515 = vmatpush.xpose.msra.mxu0 0.0
    %516 = vmatpush.xpose.msra.mxu0 0.0
    %517 = vmatpush.xpose.msra.mxu0 0.0
    %518 = vmatpush.xpose.msra.mxu0 %v502
    %519 = vmatpush.xpose.msra.mxu0 %v499
    %520 = vmatmul.f32.gmra.mxu0 %v493
    %v521 = vpop.f32.mrf.mxu0
    %v522 = vadd.f32 0.0, %v521
    %523 = vmatmul.f32.gmra.mxu0 %v496
    %v524 = vpop.f32.mrf.mxu0
    %v525 = vadd.f32 0.0, %v524
    %526 = vdwg.mxu0
    %v527 = vmul.f32 %v487, 0.35355338
    %v528 = vmul.f32 %v490, 0.35355338
    %v529 = vmul.f32 %v522, 0.35355338
    %v530 = vmul.f32 %v525, 0.35355338
    %v531 = vsel %vm236, %v527, -inf
    %532 = vmax.xlane.f32.xlu0 %v531
    %v533 = vpop.xlane.xlu0 %532
    %v534 = vsel %vm236, %v528, -inf
    %535 = vmax.xlane.f32.xlu0 %v534
    %v536 = vpop.xlane.xlu0 %535
    %v537 = vsel %vm236, %v529, -inf
    %538 = vmax.xlane.f32.xlu0 %v537
    %v539 = vpop.xlane.xlu0 %538
    %v540 = vsel %vm236, %v530, -inf
    %541 = vmax.xlane.f32.xlu0 %v540
    %v542 = vpop.xlane.xlu0 %541
    %v543 = vsub.f32 %v527, %v533
    %v544 = vsub.f32 %v528, %v536
    %v545 = vsub.f32 %v529, %v539
    %v546 = vsub.f32 %v530, %v542
    %v547 = vmul.f32 %v543, 1.442695
    %v548 = vpow.pop %v547
    %v549 = vmul.f32 %v544, 1.442695
    %v550 = vpow.pop %v549
    %v551 = vmul.f32 %v545, 1.442695
    %v552 = vpow.pop %v551
    %v553 = vmul.f32 %v546, 1.442695
    %v554 = vpow.pop %v553
    %v555 = vsel %vm236, %v548, 0.0
    %556 = vadd.xlane.f32.xlu0 %v555
    %v557 = vpop.xlane.xlu0 %556
    %v558 = vsel %vm236, %v550, 0.0
    %559 = vadd.xlane.f32.xlu0 %v558
    %v560 = vpop.xlane.xlu0 %559
    %v561 = vsel %vm236, %v552, 0.0
    %562 = vadd.xlane.f32.xlu0 %v561
    %v563 = vpop.xlane.xlu0 %562
    %v564 = vsel %vm236, %v554, 0.0
    %565 = vadd.xlane.f32.xlu0 %v564
    %v566 = vpop.xlane.xlu0 %565
    %v567 = vrcp.pop %v557
    %v568 = vrcp.pop %v560
    %v569 = vrcp.pop %v563
    %v570 = vrcp.pop %v566
    %v571 = vmul.f32 %v548, %v567
    %v572 = vmul.f32 %v550, %v568
    %v573 = vmul.f32 %v552, %v569
    %v574 = vmul.f32 %v554, %v570
    %v576 = vsel %vm236, %v571, 0
    %v579 = vsel %vm236, %v572, 0
    %581 = vmatpush.msra.mxu0 0.0
    %582 = vmatpush.msra.mxu0 0.0
    %583 = vmatpush.msra.mxu0 0.0
    %584 = vmatpush.msra.mxu0 0.0
    %585 = vmatpush.msra.mxu0 0.0
    %586 = vmatpush.msra.mxu0 0.0
    %587 = vmatpush.msra.mxu0 0.0
    %588 = vmatpush.msra.mxu0 0.0
    %589 = vmatpush.msra.mxu0 0.0
    %590 = vmatpush.msra.mxu0 0.0
    %591 = vmatpush.msra.mxu0 0.0
    %592 = vmatpush.msra.mxu0 0.0
    %593 = vmatpush.msra.mxu0 0.0
    %594 = vmatpush.msra.mxu0 0.0
    %595 = vmatpush.msra.mxu0 %v449
    %596 = vmatpush.msra.mxu0 %v446
    %597 = vmatmul.f32.gmra.mxu0 %v576
    %v598 = vpop.f32.mrf.mxu0
    %v599 = vadd.f32 0.0, %v598
    %600 = vmatmul.f32.gmra.mxu0 %v579
    %v601 = vpop.f32.mrf.mxu0
    %v602 = vadd.f32 0.0, %v601
    %603 = vdwg.mxu0
    %v605 = vsel %vm236, %v573, 0
    %v608 = vsel %vm236, %v574, 0
    %610 = vmatpush.msra.mxu0 0.0
    %611 = vmatpush.msra.mxu0 0.0
    %612 = vmatpush.msra.mxu0 0.0
    %613 = vmatpush.msra.mxu0 0.0
    %614 = vmatpush.msra.mxu0 0.0
    %615 = vmatpush.msra.mxu0 0.0
    %616 = vmatpush.msra.mxu0 0.0
    %617 = vmatpush.msra.mxu0 0.0
    %618 = vmatpush.msra.mxu0 0.0
    %619 = vmatpush.msra.mxu0 0.0
    %620 = vmatpush.msra.mxu0 0.0
    %621 = vmatpush.msra.mxu0 0.0
    %622 = vmatpush.msra.mxu0 0.0
    %623 = vmatpush.msra.mxu0 0.0
    %624 = vmatpush.msra.mxu0 %v455
    %625 = vmatpush.msra.mxu0 %v452
    %626 = vmatmul.f32.gmra.mxu0 %v605
    %v627 = vpop.f32.mrf.mxu0
    %v628 = vadd.f32 0.0, %v627
    %629 = vmatmul.f32.gmra.mxu0 %v608
    %v630 = vpop.f32.mrf.mxu0
    %v631 = vadd.f32 0.0, %v630
    %632 = vdwg.mxu0
    %s633 = scalar_lea.vmem %s7, 8
    %v634 = vld [vmem:[%s633] sm:$0xff]
    %v636 = vsel %vm161, %v599, 0
    %v639 = vsel %vm161, %v602, 0
    %v642 = vsel %vm161, %v628, 0
    %v645 = vsel %vm161, %v631, 0
    %647 = vmatpush.msra.mxu0 0.0
    %648 = vmatpush.msra.mxu0 0.0
    %649 = vmatpush.msra.mxu0 0.0
    %650 = vmatpush.msra.mxu0 0.0
    %651 = vmatpush.msra.mxu0 0.0
    %652 = vmatpush.msra.mxu0 0.0
    %653 = vmatpush.msra.mxu0 0.0
    %654 = vmatpush.msra.mxu0 0.0
    %655 = vmatpush.msra.mxu0 0.0
    %656 = vmatpush.msra.mxu0 0.0
    %657 = vmatpush.msra.mxu0 0.0
    %658 = vmatpush.msra.mxu0 0.0
    %659 = vmatpush.msra.mxu0 0.0
    %660 = vmatpush.msra.mxu0 0.0
    %661 = vmatpush.msra.mxu0 0.0
    %662 = vmatpush.msra.mxu0 %v634
    %663 = vmatmul.f32.gmra.mxu0 %v636
    %v664 = vpop.f32.mrf.mxu0
    %v665 = vadd.f32 0.0, %v664
    %666 = vmatmul.f32.gmra.mxu0 %v639
    %v667 = vpop.f32.mrf.mxu0
    %v668 = vadd.f32 0.0, %v667
    %669 = vmatmul.f32.gmra.mxu0 %v642
    %v670 = vpop.f32.mrf.mxu0
    %v671 = vadd.f32 0.0, %v670
    %672 = vmatmul.f32.gmra.mxu0 %v645
    %v673 = vpop.f32.mrf.mxu0
    %v674 = vadd.f32 0.0, %v673
    %675 = vdwg.mxu0
    %v677 = vsel %vm161, %v305, 0
    %v680 = vsel %vm161, %v308, 0
    %v683 = vsel %vm161, %v334, 0
    %v686 = vsel %vm161, %v337, 0
    %688 = vmatpush.msra.mxu0 0.0
    %689 = vmatpush.msra.mxu0 0.0
    %690 = vmatpush.msra.mxu0 0.0
    %691 = vmatpush.msra.mxu0 0.0
    %692 = vmatpush.msra.mxu0 0.0
    %693 = vmatpush.msra.mxu0 0.0
    %694 = vmatpush.msra.mxu0 0.0
    %695 = vmatpush.msra.mxu0 0.0
    %696 = vmatpush.msra.mxu0 0.0
    %697 = vmatpush.msra.mxu0 0.0
    %698 = vmatpush.msra.mxu0 0.0
    %699 = vmatpush.msra.mxu0 0.0
    %700 = vmatpush.msra.mxu0 0.0
    %701 = vmatpush.msra.mxu0 0.0
    %702 = vmatpush.msra.mxu0 0.0
    %703 = vmatpush.msra.mxu0 %v339
    %704 = vmatmul.f32.gmra.mxu0 %v677
    %v705 = vpop.f32.mrf.mxu0
    %v706 = vadd.f32 %v665, %v705
    %707 = vmatmul.f32.gmra.mxu0 %v680
    %v708 = vpop.f32.mrf.mxu0
    %v709 = vadd.f32 %v668, %v708
    %710 = vmatmul.f32.gmra.mxu0 %v683
    %v711 = vpop.f32.mrf.mxu0
    %v712 = vadd.f32 %v671, %v711
    %713 = vmatmul.f32.gmra.mxu0 %v686
    %v714 = vpop.f32.mrf.mxu0
    %v715 = vadd.f32 %v674, %v714
    %716 = vdwg.mxu0
    %s717 = scalar_lea.vmem %s1, 64
    %v718 = vld [vmem:[%s717] sm:$0xff]
    %v719 = vld [vmem:[%s717 + $0x8] sm:$0xff]
    %v720 = vld [vmem:[%s717 + $0x10] sm:$0xff]
    %v721 = vld [vmem:[%s717 + $0x18] sm:$0xff]
    %s722 = scalar_lea.vmem %s2, 2
    %v723 = vld [vmem:[%s722] sm:$0x1]
    %v725 = vperm.slane %v723, 0
    %727 = vmatpush.msra.mxu0 0.0
    %728 = vmatpush.msra.mxu0 0.0
    %729 = vmatpush.msra.mxu0 0.0
    %730 = vmatpush.msra.mxu0 0.0
    %731 = vmatpush.msra.mxu0 0.0
    %732 = vmatpush.msra.mxu0 0.0
    %733 = vmatpush.msra.mxu0 0.0
    %734 = vmatpush.msra.mxu0 0.0
    %735 = vmatpush.msra.mxu0 0.0
    %736 = vmatpush.msra.mxu0 0.0
    %737 = vmatpush.msra.mxu0 0.0
    %738 = vmatpush.msra.mxu0 0.0
    %739 = vmatpush.msra.mxu0 %v721
    %740 = vmatpush.msra.mxu0 %v720
    %741 = vmatpush.msra.mxu0 %v719
    %742 = vmatpush.msra.mxu0 %v718
    %743 = vmatmul.f32.gmra.mxu0 %v47
    %v744 = vpop.f32.mrf.mxu0
    %v745 = vadd.f32 %v725, %v744
    %746 = vmatmul.f32.gmra.mxu0 %v50
    %v747 = vpop.f32.mrf.mxu0
    %v748 = vadd.f32 %v725, %v747
    %749 = vmatmul.f32.gmra.mxu0 %v53
    %v750 = vpop.f32.mrf.mxu0
    %v751 = vadd.f32 %v725, %v750
    %752 = vmatmul.f32.gmra.mxu0 %v56
    %v753 = vpop.f32.mrf.mxu0
    %v754 = vadd.f32 %v725, %v753
    %755 = vdwg.mxu0
    %s756 = scalar_lea.vmem %s3, 64
    %v757 = vld [vmem:[%s756] sm:$0xff]
    %v758 = vld [vmem:[%s756 + $0x8] sm:$0xff]
    %v759 = vld [vmem:[%s756 + $0x10] sm:$0xff]
    %v760 = vld [vmem:[%s756 + $0x18] sm:$0xff]
    %s761 = scalar_lea.vmem %s4, 2
    %v762 = vld [vmem:[%s761] sm:$0x1]
    %v764 = vperm.slane %v762, 0
    %766 = vmatpush.msra.mxu0 0.0
    %767 = vmatpush.msra.mxu0 0.0
    %768 = vmatpush.msra.mxu0 0.0
    %769 = vmatpush.msra.mxu0 0.0
    %770 = vmatpush.msra.mxu0 0.0
    %771 = vmatpush.msra.mxu0 0.0
    %772 = vmatpush.msra.mxu0 0.0
    %773 = vmatpush.msra.mxu0 0.0
    %774 = vmatpush.msra.mxu0 0.0
    %775 = vmatpush.msra.mxu0 0.0
    %776 = vmatpush.msra.mxu0 0.0
    %777 = vmatpush.msra.mxu0 0.0
    %778 = vmatpush.msra.mxu0 %v760
    %779 = vmatpush.msra.mxu0 %v759
    %780 = vmatpush.msra.mxu0 %v758
    %781 = vmatpush.msra.mxu0 %v757
    %782 = vmatmul.f32.gmra.mxu0 %v47
    %v783 = vpop.f32.mrf.mxu0
    %v784 = vadd.f32 %v764, %v783
    %785 = vmatmul.f32.gmra.mxu0 %v50
    %v786 = vpop.f32.mrf.mxu0
    %v787 = vadd.f32 %v764, %v786
    %788 = vmatmul.f32.gmra.mxu0 %v53
    %v789 = vpop.f32.mrf.mxu0
    %v790 = vadd.f32 %v764, %v789
    %791 = vmatmul.f32.gmra.mxu0 %v56
    %v792 = vpop.f32.mrf.mxu0
    %v793 = vadd.f32 %v764, %v792
    %794 = vdwg.mxu0
    %s795 = scalar_lea.vmem %s5, 64
    %v796 = vld [vmem:[%s795] sm:$0xff]
    %v797 = vld [vmem:[%s795 + $0x8] sm:$0xff]
    %v798 = vld [vmem:[%s795 + $0x10] sm:$0xff]
    %v799 = vld [vmem:[%s795 + $0x18] sm:$0xff]
    %s800 = scalar_lea.vmem %s6, 2
    %v801 = vld [vmem:[%s800] sm:$0x1]
    %v803 = vperm.slane %v801, 0
    %805 = vmatpush.msra.mxu0 0.0
    %806 = vmatpush.msra.mxu0 0.0
    %807 = vmatpush.msra.mxu0 0.0
    %808 = vmatpush.msra.mxu0 0.0
    %809 = vmatpush.msra.mxu0 0.0
    %810 = vmatpush.msra.mxu0 0.0
    %811 = vmatpush.msra.mxu0 0.0
    %812 = vmatpush.msra.mxu0 0.0
    %813 = vmatpush.msra.mxu0 0.0
    %814 = vmatpush.msra.mxu0 0.0
    %815 = vmatpush.msra.mxu0 0.0
    %816 = vmatpush.msra.mxu0 0.0
    %817 = vmatpush.msra.mxu0 %v799
    %818 = vmatpush.msra.mxu0 %v798
    %819 = vmatpush.msra.mxu0 %v797
    %820 = vmatpush.msra.mxu0 %v796
    %821 = vmatmul.f32.gmra.mxu0 %v47
    %v822 = vpop.f32.mrf.mxu0
    %v823 = vadd.f32 %v803, %v822
    %824 = vmatmul.f32.gmra.mxu0 %v50
    %v825 = vpop.f32.mrf.mxu0
    %v826 = vadd.f32 %v803, %v825
    %827 = vmatmul.f32.gmra.mxu0 %v53
    %v828 = vpop.f32.mrf.mxu0
    %v829 = vadd.f32 %v803, %v828
    %830 = vmatmul.f32.gmra.mxu0 %v56
    %v831 = vpop.f32.mrf.mxu0
    %v832 = vadd.f32 %v803, %v831
    %833 = vdwg.mxu0
    %v835 = vsel %vm161, %v745, 0
    %v838 = vsel %vm161, %v748, 0
    %v841 = vsel %vm161, %v784, 0
    %v844 = vsel %vm161, %v787, 0
    %846 = vmatpush.xpose.msra.mxu0 0.0
    %847 = vmatpush.xpose.msra.mxu0 0.0
    %848 = vmatpush.xpose.msra.mxu0 0.0
    %849 = vmatpush.xpose.msra.mxu0 0.0
    %850 = vmatpush.xpose.msra.mxu0 0.0
    %851 = vmatpush.xpose.msra.mxu0 0.0
    %852 = vmatpush.xpose.msra.mxu0 0.0
    %853 = vmatpush.xpose.msra.mxu0 0.0
    %854 = vmatpush.xpose.msra.mxu0 0.0
    %855 = vmatpush.xpose.msra.mxu0 0.0
    %856 = vmatpush.xpose.msra.mxu0 0.0
    %857 = vmatpush.xpose.msra.mxu0 0.0
    %858 = vmatpush.xpose.msra.mxu0 0.0
    %859 = vmatpush.xpose.msra.mxu0 0.0
    %860 = vmatpush.xpose.msra.mxu0 %v844
    %861 = vmatpush.xpose.msra.mxu0 %v841
    %862 = vmatmul.f32.gmra.mxu0 %v835
    %v863 = vpop.f32.mrf.mxu0
    %v864 = vadd.f32 0.0, %v863
    %865 = vmatmul.f32.gmra.mxu0 %v838
    %v866 = vpop.f32.mrf.mxu0
    %v867 = vadd.f32 0.0, %v866
    %868 = vdwg.mxu0
    %v870 = vsel %vm161, %v751, 0
    %v873 = vsel %vm161, %v754, 0
    %v876 = vsel %vm161, %v790, 0
    %v879 = vsel %vm161, %v793, 0
    %881 = vmatpush.xpose.msra.mxu0 0.0
    %882 = vmatpush.xpose.msra.mxu0 0.0
    %883 = vmatpush.xpose.msra.mxu0 0.0
    %884 = vmatpush.xpose.msra.mxu0 0.0
    %885 = vmatpush.xpose.msra.mxu0 0.0
    %886 = vmatpush.xpose.msra.mxu0 0.0
    %887 = vmatpush.xpose.msra.mxu0 0.0
    %888 = vmatpush.xpose.msra.mxu0 0.0
    %889 = vmatpush.xpose.msra.mxu0 0.0
    %890 = vmatpush.xpose.msra.mxu0 0.0
    %891 = vmatpush.xpose.msra.mxu0 0.0
    %892 = vmatpush.xpose.msra.mxu0 0.0
    %893 = vmatpush.xpose.msra.mxu0 0.0
    %894 = vmatpush.xpose.msra.mxu0 0.0
    %895 = vmatpush.xpose.msra.mxu0 %v879
    %896 = vmatpush.xpose.msra.mxu0 %v876
    %897 = vmatmul.f32.gmra.mxu0 %v870
    %v898 = vpop.f32.mrf.mxu0
    %v899 = vadd.f32 0.0, %v898
    %900 = vmatmul.f32.gmra.mxu0 %v873
    %v901 = vpop.f32.mrf.mxu0
    %v902 = vadd.f32 0.0, %v901
    %903 = vdwg.mxu0
    %v904 = vmul.f32 %v864, 0.35355338
    %v905 = vmul.f32 %v867, 0.35355338
    %v906 = vmul.f32 %v899, 0.35355338
    %v907 = vmul.f32 %v902, 0.35355338
    %v908 = vsel %vm236, %v904, -inf
    %909 = vmax.xlane.f32.xlu0 %v908
    %v910 = vpop.xlane.xlu0 %909
    %v911 = vsel %vm236, %v905, -inf
    %912 = vmax.xlane.f32.xlu0 %v911
    %v913 = vpop.xlane.xlu0 %912
    %v914 = vsel %vm236, %v906, -inf
    %915 = vmax.xlane.f32.xlu0 %v914
    %v916 = vpop.xlane.xlu0 %915
    %v917 = vsel %vm236, %v907, -inf
    %918 = vmax.xlane.f32.xlu0 %v917
    %v919 = vpop.xlane.xlu0 %918
    %v920 = vsub.f32 %v904, %v910
    %v921 = vsub.f32 %v905, %v913
    %v922 = vsub.f32 %v906, %v916
    %v923 = vsub.f32 %v907, %v919
    %v924 = vmul.f32 %v920, 1.442695
    %v925 = vpow.pop %v924
    %v926 = vmul.f32 %v921, 1.442695
    %v927 = vpow.pop %v926
    %v928 = vmul.f32 %v922, 1.442695
    %v929 = vpow.pop %v928
    %v930 = vmul.f32 %v923, 1.442695
    %v931 = vpow.pop %v930
    %v932 = vsel %vm236, %v925, 0.0
    %933 = vadd.xlane.f32.xlu0 %v932
    %v934 = vpop.xlane.xlu0 %933
    %v935 = vsel %vm236, %v927, 0.0
    %936 = vadd.xlane.f32.xlu0 %v935
    %v937 = vpop.xlane.xlu0 %936
    %v938 = vsel %vm236, %v929, 0.0
    %939 = vadd.xlane.f32.xlu0 %v938
    %v940 = vpop.xlane.xlu0 %939
    %v941 = vsel %vm236, %v931, 0.0
    %942 = vadd.xlane.f32.xlu0 %v941
    %v943 = vpop.xlane.xlu0 %942
    %v944 = vrcp.pop %v934
    %v945 = vrcp.pop %v937
    %v946 = vrcp.pop %v940
    %v947 = vrcp.pop %v943
    %v948 = vmul.f32 %v925, %v944
    %v949 = vmul.f32 %v927, %v945
    %v950 = vmul.f32 %v929, %v946
    %v951 = vmul.f32 %v931, %v947
    %v953 = vsel %vm236, %v948, 0
    %v956 = vsel %vm236, %v949, 0
    %958 = vmatpush.msra.mxu0 0.0
    %959 = vmatpush.msra.mxu0 0.0
    %960 = vmatpush.msra.mxu0 0.0
    %961 = vmatpush.msra.mxu0 0.0
    %962 = vmatpush.msra.mxu0 0.0
    %963 = vmatpush.msra.mxu0 0.0
    %964 = vmatpush.msra.mxu0 0.0
    %965 = vmatpush.msra.mxu0 0.0
    %966 = vmatpush.msra.mxu0 0.0
    %967 = vmatpush.msra.mxu0 0.0
    %968 = vmatpush.msra.mxu0 0.0
    %969 = vmatpush.msra.mxu0 0.0
    %970 = vmatpush.msra.mxu0 0.0
    %971 = vmatpush.msra.mxu0 0.0
    %972 = vmatpush.msra.mxu0 %v826
    %973 = vmatpush.msra.mxu0 %v823
    %974 = vmatmul.f32.gmra.mxu0 %v953
    %v975 = vpop.f32.mrf.mxu0
    %v976 = vadd.f32 0.0, %v975
    %977 = vmatmul.f32.gmra.mxu0 %v956
    %v978 = vpop.f32.mrf.mxu0
    %v979 = vadd.f32 0.0, %v978
    %980 = vdwg.mxu0
    %v982 = vsel %vm236, %v950, 0
    %v985 = vsel %vm236, %v951, 0
    %987 = vmatpush.msra.mxu0 0.0
    %988 = vmatpush.msra.mxu0 0.0
    %989 = vmatpush.msra.mxu0 0.0
    %990 = vmatpush.msra.mxu0 0.0
    %991 = vmatpush.msra.mxu0 0.0
    %992 = vmatpush.msra.mxu0 0.0
    %993 = vmatpush.msra.mxu0 0.0
    %994 = vmatpush.msra.mxu0 0.0
    %995 = vmatpush.msra.mxu0 0.0
    %996 = vmatpush.msra.mxu0 0.0
    %997 = vmatpush.msra.mxu0 0.0
    %998 = vmatpush.msra.mxu0 0.0
    %999 = vmatpush.msra.mxu0 0.0
    %1000 = vmatpush.msra.mxu0 0.0
    %1001 = vmatpush.msra.mxu0 %v832
    %1002 = vmatpush.msra.mxu0 %v829
    %1003 = vmatmul.f32.gmra.mxu0 %v982
    %v1004 = vpop.f32.mrf.mxu0
    %v1005 = vadd.f32 0.0, %v1004
    %1006 = vmatmul.f32.gmra.mxu0 %v985
    %v1007 = vpop.f32.mrf.mxu0
    %v1008 = vadd.f32 0.0, %v1007
    %1009 = vdwg.mxu0
    %s1010 = scalar_lea.vmem %s7, 16
    %v1011 = vld [vmem:[%s1010] sm:$0xff]
    %v1013 = vsel %vm161, %v976, 0
    %v1016 = vsel %vm161, %v979, 0
    %v1019 = vsel %vm161, %v1005, 0
    %v1022 = vsel %vm161, %v1008, 0
    %1024 = vmatpush.msra.mxu0 0.0
    %1025 = vmatpush.msra.mxu0 0.0
    %1026 = vmatpush.msra.mxu0 0.0
    %1027 = vmatpush.msra.mxu0 0.0
    %1028 = vmatpush.msra.mxu0 0.0
    %1029 = vmatpush.msra.mxu0 0.0
    %1030 = vmatpush.msra.mxu0 0.0
    %1031 = vmatpush.msra.mxu0 0.0
    %1032 = vmatpush.msra.mxu0 0.0
    %1033 = vmatpush.msra.mxu0 0.0
    %1034 = vmatpush.msra.mxu0 0.0
    %1035 = vmatpush.msra.mxu0 0.0
    %1036 = vmatpush.msra.mxu0 0.0
    %1037 = vmatpush.msra.mxu0 0.0
    %1038 = vmatpush.msra.mxu0 0.0
    %1039 = vmatpush.msra.mxu0 %v1011
    %1040 = vmatmul.f32.gmra.mxu0 %v1013
    %v1041 = vpop.f32.mrf.mxu0
    %v1042 = vadd.f32 0.0, %v1041
    %1043 = vmatmul.f32.gmra.mxu0 %v1016
    %v1044 = vpop.f32.mrf.mxu0
    %v1045 = vadd.f32 0.0, %v1044
    %1046 = vmatmul.f32.gmra.mxu0 %v1019
    %v1047 = vpop.f32.mrf.mxu0
    %v1048 = vadd.f32 0.0, %v1047
    %1049 = vmatmul.f32.gmra.mxu0 %v1022
    %v1050 = vpop.f32.mrf.mxu0
    %v1051 = vadd.f32 0.0, %v1050
    %1052 = vdwg.mxu0
    %v1053 = vadd.f32 %v706, %v1042
    %v1054 = vadd.f32 %v709, %v1045
    %v1055 = vadd.f32 %v712, %v1048
    %v1056 = vadd.f32 %v715, %v1051
    %s1057 = scalar_lea.vmem %s1, 96
    %v1058 = vld [vmem:[%s1057] sm:$0xff]
    %v1059 = vld [vmem:[%s1057 + $0x8] sm:$0xff]
    %v1060 = vld [vmem:[%s1057 + $0x10] sm:$0xff]
    %v1061 = vld [vmem:[%s1057 + $0x18] sm:$0xff]
    %s1062 = scalar_lea.vmem %s2, 3
    %v1063 = vld [vmem:[%s1062] sm:$0x1]
    %v1065 = vperm.slane %v1063, 0
    %1067 = vmatpush.msra.mxu0 0.0
    %1068 = vmatpush.msra.mxu0 0.0
    %1069 = vmatpush.msra.mxu0 0.0
    %1070 = vmatpush.msra.mxu0 0.0
    %1071 = vmatpush.msra.mxu0 0.0
    %1072 = vmatpush.msra.mxu0 0.0
    %1073 = vmatpush.msra.mxu0 0.0
    %1074 = vmatpush.msra.mxu0 0.0
    %1075 = vmatpush.msra.mxu0 0.0
    %1076 = vmatpush.msra.mxu0 0.0
    %1077 = vmatpush.msra.mxu0 0.0
    %1078 = vmatpush.msra.mxu0 0.0
    %1079 = vmatpush.msra.mxu0 %v1061
    %1080 = vmatpush.msra.mxu0 %v1060
    %1081 = vmatpush.msra.mxu0 %v1059
    %1082 = vmatpush.msra.mxu0 %v1058
    %1083 = vmatmul.f32.gmra.mxu0 %v47
    %v1084 = vpop.f32.mrf.mxu0
    %v1085 = vadd.f32 %v1065, %v1084
    %1086 = vmatmul.f32.gmra.mxu0 %v50
    %v1087 = vpop.f32.mrf.mxu0
    %v1088 = vadd.f32 %v1065, %v1087
    %1089 = vmatmul.f32.gmra.mxu0 %v53
    %v1090 = vpop.f32.mrf.mxu0
    %v1091 = vadd.f32 %v1065, %v1090
    %1092 = vmatmul.f32.gmra.mxu0 %v56
    %v1093 = vpop.f32.mrf.mxu0
    %v1094 = vadd.f32 %v1065, %v1093
    %1095 = vdwg.mxu0
    %s1096 = scalar_lea.vmem %s3, 96
    %v1097 = vld [vmem:[%s1096] sm:$0xff]
    %v1098 = vld [vmem:[%s1096 + $0x8] sm:$0xff]
    %v1099 = vld [vmem:[%s1096 + $0x10] sm:$0xff]
    %v1100 = vld [vmem:[%s1096 + $0x18] sm:$0xff]
    %s1101 = scalar_lea.vmem %s4, 3
    %v1102 = vld [vmem:[%s1101] sm:$0x1]
    %v1104 = vperm.slane %v1102, 0
    %1106 = vmatpush.msra.mxu0 0.0
    %1107 = vmatpush.msra.mxu0 0.0
    %1108 = vmatpush.msra.mxu0 0.0
    %1109 = vmatpush.msra.mxu0 0.0
    %1110 = vmatpush.msra.mxu0 0.0
    %1111 = vmatpush.msra.mxu0 0.0
    %1112 = vmatpush.msra.mxu0 0.0
    %1113 = vmatpush.msra.mxu0 0.0
    %1114 = vmatpush.msra.mxu0 0.0
    %1115 = vmatpush.msra.mxu0 0.0
    %1116 = vmatpush.msra.mxu0 0.0
    %1117 = vmatpush.msra.mxu0 0.0
    %1118 = vmatpush.msra.mxu0 %v1100
    %1119 = vmatpush.msra.mxu0 %v1099
    %1120 = vmatpush.msra.mxu0 %v1098
    %1121 = vmatpush.msra.mxu0 %v1097
    %1122 = vmatmul.f32.gmra.mxu0 %v47
    %v1123 = vpop.f32.mrf.mxu0
    %v1124 = vadd.f32 %v1104, %v1123
    %1125 = vmatmul.f32.gmra.mxu0 %v50
    %v1126 = vpop.f32.mrf.mxu0
    %v1127 = vadd.f32 %v1104, %v1126
    %1128 = vmatmul.f32.gmra.mxu0 %v53
    %v1129 = vpop.f32.mrf.mxu0
    %v1130 = vadd.f32 %v1104, %v1129
    %1131 = vmatmul.f32.gmra.mxu0 %v56
    %v1132 = vpop.f32.mrf.mxu0
    %v1133 = vadd.f32 %v1104, %v1132
    %1134 = vdwg.mxu0
    %s1135 = scalar_lea.vmem %s5, 96
    %v1136 = vld [vmem:[%s1135] sm:$0xff]
    %v1137 = vld [vmem:[%s1135 + $0x8] sm:$0xff]
    %v1138 = vld [vmem:[%s1135 + $0x10] sm:$0xff]
    %v1139 = vld [vmem:[%s1135 + $0x18] sm:$0xff]
    %s1140 = scalar_lea.vmem %s6, 3
    %v1141 = vld [vmem:[%s1140] sm:$0x1]
    %v1143 = vperm.slane %v1141, 0
    %1145 = vmatpush.msra.mxu0 0.0
    %1146 = vmatpush.msra.mxu0 0.0
    %1147 = vmatpush.msra.mxu0 0.0
    %1148 = vmatpush.msra.mxu0 0.0
    %1149 = vmatpush.msra.mxu0 0.0
    %1150 = vmatpush.msra.mxu0 0.0
    %1151 = vmatpush.msra.mxu0 0.0
    %1152 = vmatpush.msra.mxu0 0.0
    %1153 = vmatpush.msra.mxu0 0.0
    %1154 = vmatpush.msra.mxu0 0.0
    %1155 = vmatpush.msra.mxu0 0.0
    %1156 = vmatpush.msra.mxu0 0.0
    %1157 = vmatpush.msra.mxu0 %v1139
    %1158 = vmatpush.msra.mxu0 %v1138
    %1159 = vmatpush.msra.mxu0 %v1137
    %1160 = vmatpush.msra.mxu0 %v1136
    %1161 = vmatmul.f32.gmra.mxu0 %v47
    %v1162 = vpop.f32.mrf.mxu0
    %v1163 = vadd.f32 %v1143, %v1162
    %1164 = vmatmul.f32.gmra.mxu0 %v50
    %v1165 = vpop.f32.mrf.mxu0
    %v1166 = vadd.f32 %v1143, %v1165
    %1167 = vmatmul.f32.gmra.mxu0 %v53
    %v1168 = vpop.f32.mrf.mxu0
    %v1169 = vadd.f32 %v1143, %v1168
    %1170 = vmatmul.f32.gmra.mxu0 %v56
    %v1171 = vpop.f32.mrf.mxu0
    %v1172 = vadd.f32 %v1143, %v1171
    %1173 = vdwg.mxu0
    %v1175 = vsel %vm161, %v1085, 0
    %v1178 = vsel %vm161, %v1088, 0
    %v1181 = vsel %vm161, %v1124, 0
    %v1184 = vsel %vm161, %v1127, 0
    %1186 = vmatpush.xpose.msra.mxu0 0.0
    %1187 = vmatpush.xpose.msra.mxu0 0.0
    %1188 = vmatpush.xpose.msra.mxu0 0.0
    %1189 = vmatpush.xpose.msra.mxu0 0.0
    %1190 = vmatpush.xpose.msra.mxu0 0.0
    %1191 = vmatpush.xpose.msra.mxu0 0.0
    %1192 = vmatpush.xpose.msra.mxu0 0.0
    %1193 = vmatpush.xpose.msra.mxu0 0.0
    %1194 = vmatpush.xpose.msra.mxu0 0.0
    %1195 = vmatpush.xpose.msra.mxu0 0.0
    %1196 = vmatpush.xpose.msra.mxu0 0.0
    %1197 = vmatpush.xpose.msra.mxu0 0.0
    %1198 = vmatpush.xpose.msra.mxu0 0.0
    %1199 = vmatpush.xpose.msra.mxu0 0.0
    %1200 = vmatpush.xpose.msra.mxu0 %v1184
    %1201 = vmatpush.xpose.msra.mxu0 %v1181
    %1202 = vmatmul.f32.gmra.mxu0 %v1175
    %v1203 = vpop.f32.mrf.mxu0
    %v1204 = vadd.f32 0.0, %v1203
    %1205 = vmatmul.f32.gmra.mxu0 %v1178
    %v1206 = vpop.f32.mrf.mxu0
    %v1207 = vadd.f32 0.0, %v1206
    %1208 = vdwg.mxu0
    %v1210 = vsel %vm161, %v1091, 0
    %v1213 = vsel %vm161, %v1094, 0
    %v1216 = vsel %vm161, %v1130, 0
    %v1219 = vsel %vm161, %v1133, 0
    %1221 = vmatpush.xpose.msra.mxu0 0.0
    %1222 = vmatpush.xpose.msra.mxu0 0.0
    %1223 = vmatpush.xpose.msra.mxu0 0.0
    %1224 = vmatpush.xpose.msra.mxu0 0.0
    %1225 = vmatpush.xpose.msra.mxu0 0.0
    %1226 = vmatpush.xpose.msra.mxu0 0.0
    %1227 = vmatpush.xpose.msra.mxu0 0.0
    %1228 = vmatpush.xpose.msra.mxu0 0.0
    %1229 = vmatpush.xpose.msra.mxu0 0.0
    %1230 = vmatpush.xpose.msra.mxu0 0.0
    %1231 = vmatpush.xpose.msra.mxu0 0.0
    %1232 = vmatpush.xpose.msra.mxu0 0.0
    %1233 = vmatpush.xpose.msra.mxu0 0.0
    %1234 = vmatpush.xpose.msra.mxu0 0.0
    %1235 = vmatpush.xpose.msra.mxu0 %v1219
    %1236 = vmatpush.xpose.msra.mxu0 %v1216
    %1237 = vmatmul.f32.gmra.mxu0 %v1210
    %v1238 = vpop.f32.mrf.mxu0
    %v1239 = vadd.f32 0.0, %v1238
    %1240 = vmatmul.f32.gmra.mxu0 %v1213
    %v1241 = vpop.f32.mrf.mxu0
    %v1242 = vadd.f32 0.0, %v1241
    %1243 = vdwg.mxu0
    %v1244 = vmul.f32 %v1204, 0.35355338
    %v1245 = vmul.f32 %v1207, 0.35355338
    %v1246 = vmul.f32 %v1239, 0.35355338
    %v1247 = vmul.f32 %v1242, 0.35355338
    %v1248 = vsel %vm236, %v1244, -inf
    %1249 = vmax.xlane.f32.xlu0 %v1248
    %v1250 = vpop.xlane.xlu0 %1249
    %v1251 = vsel %vm236, %v1245, -inf
    %1252 = vmax.xlane.f32.xlu0 %v1251
    %v1253 = vpop.xlane.xlu0 %1252
    %v1254 = vsel %vm236, %v1246, -inf
    %1255 = vmax.xlane.f32.xlu0 %v1254
    %v1256 = vpop.xlane.xlu0 %1255
    %v1257 = vsel %vm236, %v1247, -inf
    %1258 = vmax.xlane.f32.xlu0 %v1257
    %v1259 = vpop.xlane.xlu0 %1258
    %v1260 = vsub.f32 %v1244, %v1250
    %v1261 = vsub.f32 %v1245, %v1253
    %v1262 = vsub.f32 %v1246, %v1256
    %v1263 = vsub.f32 %v1247, %v1259
    %v1264 = vmul.f32 %v1260, 1.442695
    %v1265 = vpow.pop %v1264
    %v1266 = vmul.f32 %v1261, 1.442695
    %v1267 = vpow.pop %v1266
    %v1268 = vmul.f32 %v1262, 1.442695
    %v1269 = vpow.pop %v1268
    %v1270 = vmul.f32 %v1263, 1.442695
    %v1271 = vpow.pop %v1270
    %v1272 = vsel %vm236, %v1265, 0.0
    %1273 = vadd.xlane.f32.xlu0 %v1272
    %v1274 = vpop.xlane.xlu0 %1273
    %v1275 = vsel %vm236, %v1267, 0.0
    %1276 = vadd.xlane.f32.xlu0 %v1275
    %v1277 = vpop.xlane.xlu0 %1276
    %v1278 = vsel %vm236, %v1269, 0.0
    %1279 = vadd.xlane.f32.xlu0 %v1278
    %v1280 = vpop.xlane.xlu0 %1279
    %v1281 = vsel %vm236, %v1271, 0.0
    %1282 = vadd.xlane.f32.xlu0 %v1281
    %v1283 = vpop.xlane.xlu0 %1282
    %v1284 = vrcp.pop %v1274
    %v1285 = vrcp.pop %v1277
    %v1286 = vrcp.pop %v1280
    %v1287 = vrcp.pop %v1283
    %v1288 = vmul.f32 %v1265, %v1284
    %v1289 = vmul.f32 %v1267, %v1285
    %v1290 = vmul.f32 %v1269, %v1286
    %v1291 = vmul.f32 %v1271, %v1287
    %v1293 = vsel %vm236, %v1288, 0
    %v1296 = vsel %vm236, %v1289, 0
    %1298 = vmatpush.msra.mxu0 0.0
    %1299 = vmatpush.msra.mxu0 0.0
    %1300 = vmatpush.msra.mxu0 0.0
    %1301 = vmatpush.msra.mxu0 0.0
    %1302 = vmatpush.msra.mxu0 0.0
    %1303 = vmatpush.msra.mxu0 0.0
    %1304 = vmatpush.msra.mxu0 0.0
    %1305 = vmatpush.msra.mxu0 0.0
    %1306 = vmatpush.msra.mxu0 0.0
    %1307 = vmatpush.msra.mxu0 0.0
    %1308 = vmatpush.msra.mxu0 0.0
    %1309 = vmatpush.msra.mxu0 0.0
    %1310 = vmatpush.msra.mxu0 0.0
    %1311 = vmatpush.msra.mxu0 0.0
    %1312 = vmatpush.msra.mxu0 %v1166
    %1313 = vmatpush.msra.mxu0 %v1163
    %1314 = vmatmul.f32.gmra.mxu0 %v1293
    %v1315 = vpop.f32.mrf.mxu0
    %v1316 = vadd.f32 0.0, %v1315
    %1317 = vmatmul.f32.gmra.mxu0 %v1296
    %v1318 = vpop.f32.mrf.mxu0
    %v1319 = vadd.f32 0.0, %v1318
    %1320 = vdwg.mxu0
    %v1322 = vsel %vm236, %v1290, 0
    %v1325 = vsel %vm236, %v1291, 0
    %1327 = vmatpush.msra.mxu0 0.0
    %1328 = vmatpush.msra.mxu0 0.0
    %1329 = vmatpush.msra.mxu0 0.0
    %1330 = vmatpush.msra.mxu0 0.0
    %1331 = vmatpush.msra.mxu0 0.0
    %1332 = vmatpush.msra.mxu0 0.0
    %1333 = vmatpush.msra.mxu0 0.0
    %1334 = vmatpush.msra.mxu0 0.0
    %1335 = vmatpush.msra.mxu0 0.0
    %1336 = vmatpush.msra.mxu0 0.0
    %1337 = vmatpush.msra.mxu0 0.0
    %1338 = vmatpush.msra.mxu0 0.0
    %1339 = vmatpush.msra.mxu0 0.0
    %1340 = vmatpush.msra.mxu0 0.0
    %1341 = vmatpush.msra.mxu0 %v1172
    %1342 = vmatpush.msra.mxu0 %v1169
    %1343 = vmatmul.f32.gmra.mxu0 %v1322
    %v1344 = vpop.f32.mrf.mxu0
    %v1345 = vadd.f32 0.0, %v1344
    %1346 = vmatmul.f32.gmra.mxu0 %v1325
    %v1347 = vpop.f32.mrf.mxu0
    %v1348 = vadd.f32 0.0, %v1347
    %1349 = vdwg.mxu0
    %s1350 = scalar_lea.vmem %s7, 24
    %v1351 = vld [vmem:[%s1350] sm:$0xff]
    %v1353 = vsel %vm161, %v1316, 0
    %v1356 = vsel %vm161, %v1319, 0
    %v1359 = vsel %vm161, %v1345, 0
    %v1362 = vsel %vm161, %v1348, 0
    %1364 = vmatpush.msra.mxu0 0.0
    %1365 = vmatpush.msra.mxu0 0.0
    %1366 = vmatpush.msra.mxu0 0.0
    %1367 = vmatpush.msra.mxu0 0.0
    %1368 = vmatpush.msra.mxu0 0.0
    %1369 = vmatpush.msra.mxu0 0.0
    %1370 = vmatpush.msra.mxu0 0.0
    %1371 = vmatpush.msra.mxu0 0.0
    %1372 = vmatpush.msra.mxu0 0.0
    %1373 = vmatpush.msra.mxu0 0.0
    %1374 = vmatpush.msra.mxu0 0.0
    %1375 = vmatpush.msra.mxu0 0.0
    %1376 = vmatpush.msra.mxu0 0.0
    %1377 = vmatpush.msra.mxu0 0.0
    %1378 = vmatpush.msra.mxu0 0.0
    %1379 = vmatpush.msra.mxu0 %v1351
    %1380 = vmatmul.f32.gmra.mxu0 %v1353
    %v1381 = vpop.f32.mrf.mxu0
    %v1382 = vadd.f32 0.0, %v1381
    %1383 = vmatmul.f32.gmra.mxu0 %v1356
    %v1384 = vpop.f32.mrf.mxu0
    %v1385 = vadd.f32 0.0, %v1384
    %1386 = vmatmul.f32.gmra.mxu0 %v1359
    %v1387 = vpop.f32.mrf.mxu0
    %v1388 = vadd.f32 0.0, %v1387
    %1389 = vmatmul.f32.gmra.mxu0 %v1362
    %v1390 = vpop.f32.mrf.mxu0
    %v1391 = vadd.f32 0.0, %v1390
    %1392 = vdwg.mxu0
    %v1393 = vadd.f32 %v1053, %v1382
    %v1394 = vadd.f32 %v1054, %v1385
    %v1395 = vadd.f32 %v1055, %v1388
    %v1396 = vadd.f32 %v1056, %v1391
    %v1397 = vld [vmem:[%s8] sm:$0x1]
    %v1399 = vperm.slane %v1397, 0
    %v1401 = vadd.f32 %v1393, %v1399
    %v1402 = vadd.f32 %v1394, %v1399
    %v1403 = vadd.f32 %v1395, %v1399
    %v1404 = vadd.f32 %v1396, %v1399
    %1405 = vst.msk [vmem:[#allocation2] sm:$0xff] %vm45, %v1401
    %1406 = vst.msk [vmem:[#allocation2 + $0x8] sm:$0xff] %vm45, %v1402
    %1407 = vst.msk [vmem:[#allocation2 + $0x10] sm:$0xff] %vm45, %v1403
    %1408 = vst.msk [vmem:[#allocation2 + $0x18] sm:$0xff] %vm45, %v1404
    // Predicated region
    $region38: #{attention_forward.1} parent=1 // pred_check
      _
    $region39: #{attention_forward.1} parent=1 // pred_check_branch
      %1410 = sbr.rel (0) target = $region41
    $region40: #{attention_forward.1} parent=1 // pred_region
      %1412 = vsyncadd [#allocation3], 0
      %s1413 = sshll.u32 [#allocation2], 4
      %s1414 = int_to_ptr.vmem [resolvable:$true] %s1413
      %s1415 = sshll.u32 %s9, 4
      %s1416 = int_to_ptr.hbm [resolvable:$true] %s1415
      %1421 = dma.vmem_to_hbm [thread:$0]  %s1414, 512, %s1416, [#allocation3], 128, 128, 8
    $region41: #{attention_forward.1} parent=1 // pred_fallthru
      _
    // Predicated region
    $region42: #{attention_forward.1} parent=1 // pred_check
      _
    $region43: #{attention_forward.1} parent=1 // pred_check_branch
      %1423 = sbr.rel (0) target = $region45
    $region44: #{attention_forward.1} parent=1 // pred_region
      %1425 = dma.done [#allocation3], 512
    $region45: #{attention_forward.1} parent=1 // pred_fallthru
      _
    %1426 = vsyncpa [#allocation3], 1

</llo_original>
